<compile_context>
chip_gen: v5e
topology: v5e:2x2
jax: 0.10.0
libtpu: 0.0.40
codegen_flags: <defaults>
</compile_context>

<pallas_src>
import functools

import jax
import jax.numpy as jnp
from jax.experimental import pallas as pl
from jax.experimental.pallas import tpu as pltpu


EMB_CHANNELS = 512
COMPUTE_DTYPE = jnp.bfloat16     # MXU-native operands; accumulation stays f32


def _shift_lanes(x, d):
    """Lane rotation: y[:, p] = x[:, (p + d) % n] (two static lane slices)."""
    n = x.shape[-1]
    k = d % n
    if k == 0:
        return x
    return jnp.concatenate([x[:, k:], x[:, :k]], axis=1)


# ----------------------------------------------------------------------------
# Fused per-sample kernel: up-conv -> concat -> conv1(+emb fold)+ReLU -> conv2+ReLU
# ----------------------------------------------------------------------------
def _decoder_kernel(a_up_ref, skip_ref, temb_ref, masks_ref,
                    w_up_ref, b_up_ref, w1_ref, b1_ref, w2_ref, b2_ref,
                    o_ref, a1_s, a2_s, *, W, c_act, c_out):
    # a_up_ref : (1, 4*Cin, HW) bf16   transposed-conv im2col of x (wrapper-built)
    # skip_ref : (1, Cskip, HW) bf16   skip channels-first
    # temb_ref : (1, Cout, 9)  f32     per-tap embedding-fold constants
    # masks_ref: (9, HW)       f32     3x3 border validity masks (shared)
    # w_*_ref  : (Cout, K)     bf16    lane-dense matmul weights
    # b_*_ref  : (Cout, 1)     f32
    # o_ref    : (1, Cout, HW) f32     lane-dense NCHW output
    # a1_s     : (9*Cact, HW)  bf16    conv1 im2col scratch
    # a2_s     : (9*Cout, HW)  bf16    conv2 im2col scratch
    masks_f32 = masks_ref[...]
    masks = masks_f32.astype(COMPUTE_DTYPE)

    # --- Stage 1: ConvTranspose2d(k=2, s=2) as one matmul (channels-first) ---
    up = jnp.dot(w_up_ref[...], a_up_ref[0],
                 preferred_element_type=jnp.float32)          # (Cout, HW) f32
    up = up + b_up_ref[...]
    act = jnp.concatenate([up.astype(COMPUTE_DTYPE), skip_ref[0]],
                          axis=0)                             # (Cact, HW) bf16

    # --- Stage 2: in-VMEM im2col (lane shifts + border masks), single matmul ---
    for t in range(9):
        di, dj = t // 3 - 1, t % 3 - 1
        shifted = _shift_lanes(act, di * W + dj)
        a1_s[t * c_act:(t + 1) * c_act, :] = shifted * masks[t:t + 1, :]
    y1 = jnp.dot(w1_ref[...], a1_s[...], preferred_element_type=jnp.float32)
    # Embedding fold: spatially-constant channels -> T @ border_masks (tiny dot).
    emb_bias = jnp.dot(temb_ref[0], masks_f32,
                       preferred_element_type=jnp.float32)    # (Cout, HW) f32
    h1 = jnp.maximum(y1 + b1_ref[...] + emb_bias, 0.0).astype(COMPUTE_DTYPE)

    # --- Stage 3: conv2 + bias + ReLU, same im2col trick ---
    for t in range(9):
        di, dj = t // 3 - 1, t % 3 - 1
        shifted = _shift_lanes(h1, di * W + dj)
        a2_s[t * c_out:(t + 1) * c_out, :] = shifted * masks[t:t + 1, :]
    y2 = jnp.dot(w2_ref[...], a2_s[...], preferred_element_type=jnp.float32)
    o_ref[0] = jnp.maximum(y2 + b2_ref[...], 0.0).astype(o_ref.dtype)


def _border_masks(H, W):
    """masks[t, i*W+j] = 1 if the 3x3 tap t=(ki*3+kj) hits an interior pixel."""
    i = jnp.arange(H)[:, None]
    j = jnp.arange(W)[None, :]
    rows = []
    for t in range(9):
        di, dj = t // 3 - 1, t % 3 - 1
        m = (i + di >= 0) & (i + di < H) & (j + dj >= 0) & (j + dj < W)
        rows.append(m.reshape(-1))
    return jnp.stack(rows, 0).astype(jnp.float32)             # (9, H*W)


# ----------------------------------------------------------------------------
# Deterministic stand-in for the external `embedding(x, t)` callable
# (spatially constant 512-channel sinusoidal time embedding).
# ----------------------------------------------------------------------------
def embedding_fn(t, channels=EMB_CHANNELS):
    half = channels // 2
    freqs = jnp.exp(-jnp.log(10000.0) * jnp.arange(half, dtype=jnp.float32) / half)
    args = t.astype(jnp.float32)[:, None] * freqs[None, :]
    return jnp.concatenate([jnp.sin(args), jnp.cos(args)], axis=-1)   # (N, 512)


# ----------------------------------------------------------------------------
# DecoderBlock forward
# ----------------------------------------------------------------------------
def init_decoder_block_params(key, in_channels, out_channels):
    ks = jax.random.split(key, 6)
    s = 0.05
    cat_ch = in_channels + EMB_CHANNELS
    return {
        # ConvTranspose2d weight: (Cin, Cout, 2, 2)
        "up_w": s * jax.random.normal(ks[0], (in_channels, out_channels, 2, 2), jnp.float32),
        "up_b": s * jax.random.normal(ks[1], (out_channels,), jnp.float32),
        # ConvBlock conv1: Conv2d(cat_ch -> out), conv2: Conv2d(out -> out)
        "c1_w": s * jax.random.normal(ks[2], (out_channels, cat_ch, 3, 3), jnp.float32),
        "c1_b": s * jax.random.normal(ks[3], (out_channels,), jnp.float32),
        "c2_w": s * jax.random.normal(ks[4], (out_channels, out_channels, 3, 3), jnp.float32),
        "c2_b": s * jax.random.normal(ks[5], (out_channels,), jnp.float32),
    }


@jax.jit
def decoder_block_forward(params, x_nchw, skip_nchw, t):
    N, Cin, h, w = x_nchw.shape
    Cout = params["up_b"].shape[0]
    Cskip = skip_nchw.shape[1]
    Cact = Cout + Cskip
    H, W = 2 * h, 2 * w
    HW = H * W

    # --- wrapper-side layout plumbing (tiny; no intermediate HBM round trips) ---
    # Transposed-conv im2col of x (K-order = (di, dj, ci)):
    #   a_up[n, (di,dj,ci), I*W+J] = x[n, ci, I//2, J//2] * (I%2==di) * (J%2==dj)
    x_up2 = jnp.repeat(jnp.repeat(x_nchw, 2, axis=2), 2, axis=3)        # (N,Cin,H,W)
    par = jnp.arange(2)
    mi = (jnp.arange(H)[None, :] % 2 == par[:, None]).astype(x_nchw.dtype)   # (2,H)
    mj = (jnp.arange(W)[None, :] % 2 == par[:, None]).astype(x_nchw.dtype)   # (2,W)
    pm = mi[:, None, :, None] * mj[None, :, None, :]                    # (2,2,H,W)
    a_up = (pm[None, :, :, None] * x_up2[:, None, None]).reshape(N, 4 * Cin, HW)
    a_up = a_up.astype(COMPUTE_DTYPE)

    skip_cf = skip_nchw.reshape(N, Cskip, HW).astype(COMPUTE_DTYPE)

    # Lane-dense matmul weights: (Cout, K), K-order matches the im2col rows.
    w_up_mat = jnp.transpose(params["up_w"], (2, 3, 0, 1)).reshape(4 * Cin, Cout).T
    w1_mat = jnp.transpose(params["c1_w"][:, :Cact], (2, 3, 1, 0)).reshape(9 * Cact, Cout).T
    w2_mat = jnp.transpose(params["c2_w"], (2, 3, 1, 0)).reshape(9 * Cout, Cout).T

    # Embedding fold: conv1 contribution of the 512 spatially-constant channels,
    # reduced to per-sample, per-tap constants; border correction happens
    # in-kernel via T @ masks.  (Only valid for spatially constant embeddings.)
    emb = embedding_fn(t)                                               # (N, 512)
    temb = jnp.einsum("ne,oeij->noij", emb,
                      params["c1_w"][:, Cact:]).reshape(N, Cout, 9)     # f32

    masks = _border_masks(H, W)                                         # (9, HW)

    b_up = params["up_b"].reshape(Cout, 1).astype(jnp.float32)
    b1 = params["c1_b"].reshape(Cout, 1).astype(jnp.float32)
    b2 = params["c2_b"].reshape(Cout, 1).astype(jnp.float32)

    kernel = functools.partial(_decoder_kernel, W=W, c_act=Cact, c_out=Cout)
    out = pl.pallas_call(
        kernel,
        out_shape=jax.ShapeDtypeStruct((N, Cout, HW), jnp.float32),
        grid_spec=pltpu.PrefetchScalarGridSpec(
            num_scalar_prefetch=0,
            grid=(N,),
            in_specs=[
                pl.BlockSpec((1, 4 * Cin, HW), lambda n: (n, 0, 0)),    # a_up
                pl.BlockSpec((1, Cskip, HW), lambda n: (n, 0, 0)),      # skip
                pl.BlockSpec((1, Cout, 9), lambda n: (n, 0, 0)),        # temb
                pl.BlockSpec((9, HW), lambda n: (0, 0)),                # masks (resident)
                pl.BlockSpec((Cout, 4 * Cin), lambda n: (0, 0)),        # w_up
                pl.BlockSpec((Cout, 1), lambda n: (0, 0)),              # b_up
                pl.BlockSpec((Cout, 9 * Cact), lambda n: (0, 0)),       # w1
                pl.BlockSpec((Cout, 1), lambda n: (0, 0)),              # b1
                pl.BlockSpec((Cout, 9 * Cout), lambda n: (0, 0)),       # w2
                pl.BlockSpec((Cout, 1), lambda n: (0, 0)),              # b2
            ],
            out_specs=pl.BlockSpec((1, Cout, HW), lambda n: (n, 0, 0)),
            scratch_shapes=[
                pltpu.VMEM((9 * Cact, HW), COMPUTE_DTYPE),              # conv1 im2col
                pltpu.VMEM((9 * Cout, HW), COMPUTE_DTYPE),              # conv2 im2col
            ],
        ),
        compiler_params=pltpu.CompilerParams(
            dimension_semantics=("parallel",)),
    )(a_up, skip_cf, temb, masks,
      w_up_mat.astype(COMPUTE_DTYPE), b_up,
      w1_mat.astype(COMPUTE_DTYPE), b1,
      w2_mat.astype(COMPUTE_DTYPE), b2)

    return out.reshape(N, Cout, H, W)                                   # NCHW


# ----------------------------------------------------------------------------
# Pure-XLA f32 reference (matches the PyTorch DecoderBlock semantics)
# ----------------------------------------------------------------------------
def _reference_forward(params, x_nchw, skip_nchw, t):
    N, Cin, h, w = x_nchw.shape
    Cout = params["up_b"].shape[0]
    H, W = 2 * h, 2 * w
    up = jnp.einsum("nchw,cdij->ndhiwj", x_nchw, params["up_w"]).reshape(N, Cout, H, W)
    up = up + params["up_b"][None, :, None, None]
    emb = embedding_fn(t)
    emb_b = jnp.broadcast_to(emb[:, :, None, None], (N, EMB_CHANNELS, H, W))
    cat = jnp.concatenate([up, skip_nchw, emb_b], axis=1)

    def conv3x3(x, wgt, b):
        y = jax.lax.conv_general_dilated(
            x, wgt, window_strides=(1, 1), padding=((1, 1), (1, 1)),
            dimension_numbers=("NCHW", "OIHW", "NCHW"))
        return jax.nn.relu(y + b[None, :, None, None])

    out = conv3x3(cat, params["c1_w"], params["c1_b"])
    out = conv3x3(out, params["c2_w"], params["c2_b"])
    return out


# ----------------------------------------------------------------------------
if __name__ == "__main__":
    key = jax.random.PRNGKey(0)
    k_par, k_x, k_skip, k_t = jax.random.split(key, 4)

    batch = 2                        # even: keeps both v7x TensorCores busy
    in_channels = 8
    out_channels = 4
    h = w = 8                        # x spatial; 16x16 after the up-conv

    params = init_decoder_block_params(k_par, in_channels, out_channels)
    x = jax.random.normal(k_x, (batch, in_channels, h, w), jnp.float32)
    # skip channels chosen so that up + skip + 512 == in_channels + 512
    skip = jax.random.normal(
        k_skip, (batch, in_channels - out_channels, 2 * h, 2 * w), jnp.float32)
    t = jax.random.uniform(k_t, (batch,), jnp.float32) * 100.0

    out = jax.block_until_ready(decoder_block_forward(params, x, skip, t))
    assert out.shape == (batch, out_channels, 2 * h, 2 * w), out.shape
    assert jnp.all(jnp.isfinite(out))

    # Correctness vs. f32 XLA reference (loose tolerance: bf16 operands).
    ref = _reference_forward(params, x, skip, t)
    assert jnp.allclose(out, ref, atol=7.5e-2, rtol=5e-2), float(
        jnp.max(jnp.abs(out - ref)))

    print("KERNEL_OK")
</pallas_src>

<mosaic_0001>
module attributes {stable_mosaic.version = 11 : i64} {
  func.func @_decoder_kernel(%arg0: i32, %arg1: memref<1x32x256xbf16, #tpu.memory_space<vmem>>, %arg2: memref<1x4x256xbf16, #tpu.memory_space<vmem>>, %arg3: memref<1x4x9xf32, #tpu.memory_space<vmem>>, %arg4: memref<9x256xf32, #tpu.memory_space<vmem>>, %arg5: memref<4x32xbf16, #tpu.memory_space<vmem>>, %arg6: memref<4x1xf32, #tpu.memory_space<vmem>>, %arg7: memref<4x72xbf16, #tpu.memory_space<vmem>>, %arg8: memref<4x1xf32, #tpu.memory_space<vmem>>, %arg9: memref<4x36xbf16, #tpu.memory_space<vmem>>, %arg10: memref<4x1xf32, #tpu.memory_space<vmem>>, %arg11: memref<1x4x256xf32, #tpu.memory_space<vmem>>, %arg12: memref<72x256xbf16, #tpu.memory_space<vmem>>, %arg13: memref<36x256xbf16, #tpu.memory_space<vmem>>) attributes {dimension_semantics = [#tpu.dimension_semantics<parallel>], iteration_bounds = array<i64: 2>, scalar_prefetch = 0 : i64, scratch_operands = 2 : i64, tpu.core_type = #tpu.core_type<tc>, window_params = [{transform_indices = @transform_0, window_bounds = array<i64: 1, 32, 256>}, {transform_indices = @transform_1, window_bounds = array<i64: 1, 4, 256>}, {transform_indices = @transform_2, window_bounds = array<i64: 1, 4, 9>}, {pipeline_mode = #tpu.pipeline_mode<synchronous>, transform_indices = @transform_3, window_bounds = array<i64: 9, 256>}, {pipeline_mode = #tpu.pipeline_mode<synchronous>, transform_indices = @transform_4, window_bounds = array<i64: 4, 32>}, {pipeline_mode = #tpu.pipeline_mode<synchronous>, transform_indices = @transform_5, window_bounds = array<i64: 4, 1>}, {pipeline_mode = #tpu.pipeline_mode<synchronous>, transform_indices = @transform_6, window_bounds = array<i64: 4, 72>}, {pipeline_mode = #tpu.pipeline_mode<synchronous>, transform_indices = @transform_7, window_bounds = array<i64: 4, 1>}, {pipeline_mode = #tpu.pipeline_mode<synchronous>, transform_indices = @transform_8, window_bounds = array<i64: 4, 36>}, {pipeline_mode = #tpu.pipeline_mode<synchronous>, transform_indices = @transform_9, window_bounds = array<i64: 4, 1>}, {transform_indices = @transform_10, window_bounds = array<i64: 1, 4, 256>}]} {
    %c0 = arith.constant 0 : index
    %c0_0 = arith.constant 0 : index
    %0 = vector.load %arg4[%c0, %c0_0] : memref<9x256xf32, #tpu.memory_space<vmem>>, vector<9x256xf32>
    %1 = arith.truncf %0 : vector<9x256xf32> to vector<9x256xbf16>
    %c0_1 = arith.constant 0 : index
    %c0_2 = arith.constant 0 : index
    %2 = vector.load %arg5[%c0_1, %c0_2] : memref<4x32xbf16, #tpu.memory_space<vmem>>, vector<4x32xbf16>
    %c0_3 = arith.constant 0 : index
    %c0_4 = arith.constant 0 : index
    %c0_5 = arith.constant 0 : index
    %3 = vector.load %arg1[%c0_3, %c0_4, %c0_5] : memref<1x32x256xbf16, #tpu.memory_space<vmem>>, vector<1x32x256xbf16>
    %4 = vector.shape_cast %3 : vector<1x32x256xbf16> to vector<32x256xbf16>
    %cst = arith.constant dense<0.000000e+00> : vector<4x256xf32>
    %5 = tpu.matmul %2, %4, %cst {dimension_numbers = #tpu.dot_dimension_numbers<[1], [0], [0], [1], [0, 0, 1, 1], [], []>} : vector<4x32xbf16>, vector<32x256xbf16>, vector<4x256xf32> -> vector<4x256xf32>
    %c0_6 = arith.constant 0 : index
    %c0_7 = arith.constant 0 : index
    %6 = vector.load %arg6[%c0_6, %c0_7] : memref<4x1xf32, #tpu.memory_space<vmem>>, vector<4x1xf32>
    %7 = vector.broadcast %6 : vector<4x1xf32> to vector<4x256xf32>
    %8 = arith.addf %5, %7 : vector<4x256xf32>
    %9 = arith.truncf %8 : vector<4x256xf32> to vector<4x256xbf16>
    %c0_8 = arith.constant 0 : index
    %c0_9 = arith.constant 0 : index
    %c0_10 = arith.constant 0 : index
    %10 = vector.load %arg2[%c0_8, %c0_9, %c0_10] : memref<1x4x256xbf16, #tpu.memory_space<vmem>>, vector<1x4x256xbf16>
    %11 = vector.shape_cast %10 : vector<1x4x256xbf16> to vector<4x256xbf16>
    %12 = tpu.concatenate %9, %11 in 0 : vector<4x256xbf16>, vector<4x256xbf16> -> vector<8x256xbf16>
    %13 = vector.extract_strided_slice %12 {offsets = [0, 239], sizes = [8, 17], strides = [1, 1]} : vector<8x256xbf16> to vector<8x17xbf16>
    %14 = vector.extract_strided_slice %12 {offsets = [0, 0], sizes = [8, 239], strides = [1, 1]} : vector<8x256xbf16> to vector<8x239xbf16>
    %15 = tpu.concatenate %13, %14 in 1 : vector<8x17xbf16>, vector<8x239xbf16> -> vector<8x256xbf16>
    %16 = vector.extract_strided_slice %1 {offsets = [0, 0], sizes = [1, 256], strides = [1, 1]} : vector<9x256xbf16> to vector<1x256xbf16>
    %17 = vector.broadcast %16 : vector<1x256xbf16> to vector<8x256xbf16>
    %18 = arith.mulf %15, %17 : vector<8x256xbf16>
    %c0_11 = arith.constant 0 : index
    %c0_12 = arith.constant 0 : index
    %19 = vector.load %arg12[%c0_11, %c0_12] : memref<72x256xbf16, #tpu.memory_space<vmem>>, vector<8x256xbf16>
    tpu.vector_store %arg12[%c0_11, %c0_12], %18 {strides = array<i32>} : memref<72x256xbf16, #tpu.memory_space<vmem>>, vector<8x256xbf16>,
    %20 = vector.extract_strided_slice %12 {offsets = [0, 240], sizes = [8, 16], strides = [1, 1]} : vector<8x256xbf16> to vector<8x16xbf16>
    %21 = vector.extract_strided_slice %12 {offsets = [0, 0], sizes = [8, 240], strides = [1, 1]} : vector<8x256xbf16> to vector<8x240xbf16>
    %22 = tpu.concatenate %20, %21 in 1 : vector<8x16xbf16>, vector<8x240xbf16> -> vector<8x256xbf16>
    %23 = vector.extract_strided_slice %1 {offsets = [1, 0], sizes = [1, 256], strides = [1, 1]} : vector<9x256xbf16> to vector<1x256xbf16>
    %24 = vector.broadcast %23 : vector<1x256xbf16> to vector<8x256xbf16>
    %25 = arith.mulf %22, %24 : vector<8x256xbf16>
    %c8 = arith.constant 8 : index
    %c0_13 = arith.constant 0 : index
    %26 = vector.load %arg12[%c8, %c0_13] : memref<72x256xbf16, #tpu.memory_space<vmem>>, vector<8x256xbf16>
    tpu.vector_store %arg12[%c8, %c0_13], %25 {strides = array<i32>} : memref<72x256xbf16, #tpu.memory_space<vmem>>, vector<8x256xbf16>,
    %27 = vector.extract_strided_slice %12 {offsets = [0, 241], sizes = [8, 15], strides = [1, 1]} : vector<8x256xbf16> to vector<8x15xbf16>
    %28 = vector.extract_strided_slice %12 {offsets = [0, 0], sizes = [8, 241], strides = [1, 1]} : vector<8x256xbf16> to vector<8x241xbf16>
    %29 = tpu.concatenate %27, %28 in 1 : vector<8x15xbf16>, vector<8x241xbf16> -> vector<8x256xbf16>
    %30 = vector.extract_strided_slice %1 {offsets = [2, 0], sizes = [1, 256], strides = [1, 1]} : vector<9x256xbf16> to vector<1x256xbf16>
    %31 = vector.broadcast %30 : vector<1x256xbf16> to vector<8x256xbf16>
    %32 = arith.mulf %29, %31 : vector<8x256xbf16>
    %c16 = arith.constant 16 : index
    %c0_14 = arith.constant 0 : index
    %33 = vector.load %arg12[%c16, %c0_14] : memref<72x256xbf16, #tpu.memory_space<vmem>>, vector<8x256xbf16>
    tpu.vector_store %arg12[%c16, %c0_14], %32 {strides = array<i32>} : memref<72x256xbf16, #tpu.memory_space<vmem>>, vector<8x256xbf16>,
    %34 = vector.extract_strided_slice %12 {offsets = [0, 255], sizes = [8, 1], strides = [1, 1]} : vector<8x256xbf16> to vector<8x1xbf16>
    %35 = vector.extract_strided_slice %12 {offsets = [0, 0], sizes = [8, 255], strides = [1, 1]} : vector<8x256xbf16> to vector<8x255xbf16>
    %36 = tpu.concatenate %34, %35 in 1 : vector<8x1xbf16>, vector<8x255xbf16> -> vector<8x256xbf16>
    %37 = vector.extract_strided_slice %1 {offsets = [3, 0], sizes = [1, 256], strides = [1, 1]} : vector<9x256xbf16> to vector<1x256xbf16>
    %38 = vector.broadcast %37 : vector<1x256xbf16> to vector<8x256xbf16>
    %39 = arith.mulf %36, %38 : vector<8x256xbf16>
    %c24 = arith.constant 24 : index
    %c0_15 = arith.constant 0 : index
    %40 = vector.load %arg12[%c24, %c0_15] : memref<72x256xbf16, #tpu.memory_space<vmem>>, vector<8x256xbf16>
    tpu.vector_store %arg12[%c24, %c0_15], %39 {strides = array<i32>} : memref<72x256xbf16, #tpu.memory_space<vmem>>, vector<8x256xbf16>,
    %41 = vector.extract_strided_slice %1 {offsets = [4, 0], sizes = [1, 256], strides = [1, 1]} : vector<9x256xbf16> to vector<1x256xbf16>
    %42 = vector.broadcast %41 : vector<1x256xbf16> to vector<8x256xbf16>
    %43 = arith.mulf %12, %42 : vector<8x256xbf16>
    %c32 = arith.constant 32 : index
    %c0_16 = arith.constant 0 : index
    %44 = vector.load %arg12[%c32, %c0_16] : memref<72x256xbf16, #tpu.memory_space<vmem>>, vector<8x256xbf16>
    tpu.vector_store %arg12[%c32, %c0_16], %43 {strides = array<i32>} : memref<72x256xbf16, #tpu.memory_space<vmem>>, vector<8x256xbf16>,
    %45 = vector.extract_strided_slice %12 {offsets = [0, 1], sizes = [8, 255], strides = [1, 1]} : vector<8x256xbf16> to vector<8x255xbf16>
    %46 = vector.extract_strided_slice %12 {offsets = [0, 0], sizes = [8, 1], strides = [1, 1]} : vector<8x256xbf16> to vector<8x1xbf16>
    %47 = tpu.concatenate %45, %46 in 1 : vector<8x255xbf16>, vector<8x1xbf16> -> vector<8x256xbf16>
    %48 = vector.extract_strided_slice %1 {offsets = [5, 0], sizes = [1, 256], strides = [1, 1]} : vector<9x256xbf16> to vector<1x256xbf16>
    %49 = vector.broadcast %48 : vector<1x256xbf16> to vector<8x256xbf16>
    %50 = arith.mulf %47, %49 : vector<8x256xbf16>
    %c40 = arith.constant 40 : index
    %c0_17 = arith.constant 0 : index
    %51 = vector.load %arg12[%c40, %c0_17] : memref<72x256xbf16, #tpu.memory_space<vmem>>, vector<8x256xbf16>
    tpu.vector_store %arg12[%c40, %c0_17], %50 {strides = array<i32>} : memref<72x256xbf16, #tpu.memory_space<vmem>>, vector<8x256xbf16>,
    %52 = vector.extract_strided_slice %12 {offsets = [0, 15], sizes = [8, 241], strides = [1, 1]} : vector<8x256xbf16> to vector<8x241xbf16>
    %53 = vector.extract_strided_slice %12 {offsets = [0, 0], sizes = [8, 15], strides = [1, 1]} : vector<8x256xbf16> to vector<8x15xbf16>
    %54 = tpu.concatenate %52, %53 in 1 : vector<8x241xbf16>, vector<8x15xbf16> -> vector<8x256xbf16>
    %55 = vector.extract_strided_slice %1 {offsets = [6, 0], sizes = [1, 256], strides = [1, 1]} : vector<9x256xbf16> to vector<1x256xbf16>
    %56 = vector.broadcast %55 : vector<1x256xbf16> to vector<8x256xbf16>
    %57 = arith.mulf %54, %56 : vector<8x256xbf16>
    %c48 = arith.constant 48 : index
    %c0_18 = arith.constant 0 : index
    %58 = vector.load %arg12[%c48, %c0_18] : memref<72x256xbf16, #tpu.memory_space<vmem>>, vector<8x256xbf16>
    tpu.vector_store %arg12[%c48, %c0_18], %57 {strides = array<i32>} : memref<72x256xbf16, #tpu.memory_space<vmem>>, vector<8x256xbf16>,
    %59 = vector.extract_strided_slice %12 {offsets = [0, 16], sizes = [8, 240], strides = [1, 1]} : vector<8x256xbf16> to vector<8x240xbf16>
    %60 = vector.extract_strided_slice %12 {offsets = [0, 0], sizes = [8, 16], strides = [1, 1]} : vector<8x256xbf16> to vector<8x16xbf16>
    %61 = tpu.concatenate %59, %60 in 1 : vector<8x240xbf16>, vector<8x16xbf16> -> vector<8x256xbf16>
    %62 = vector.extract_strided_slice %1 {offsets = [7, 0], sizes = [1, 256], strides = [1, 1]} : vector<9x256xbf16> to vector<1x256xbf16>
    %63 = vector.broadcast %62 : vector<1x256xbf16> to vector<8x256xbf16>
    %64 = arith.mulf %61, %63 : vector<8x256xbf16>
    %c56 = arith.constant 56 : index
    %c0_19 = arith.constant 0 : index
    %65 = vector.load %arg12[%c56, %c0_19] : memref<72x256xbf16, #tpu.memory_space<vmem>>, vector<8x256xbf16>
    tpu.vector_store %arg12[%c56, %c0_19], %64 {strides = array<i32>} : memref<72x256xbf16, #tpu.memory_space<vmem>>, vector<8x256xbf16>,
    %66 = vector.extract_strided_slice %12 {offsets = [0, 17], sizes = [8, 239], strides = [1, 1]} : vector<8x256xbf16> to vector<8x239xbf16>
    %67 = vector.extract_strided_slice %12 {offsets = [0, 0], sizes = [8, 17], strides = [1, 1]} : vector<8x256xbf16> to vector<8x17xbf16>
    %68 = tpu.concatenate %66, %67 in 1 : vector<8x239xbf16>, vector<8x17xbf16> -> vector<8x256xbf16>
    %69 = vector.extract_strided_slice %1 {offsets = [8, 0], sizes = [1, 256], strides = [1, 1]} : vector<9x256xbf16> to vector<1x256xbf16>
    %70 = vector.broadcast %69 : vector<1x256xbf16> to vector<8x256xbf16>
    %71 = arith.mulf %68, %70 : vector<8x256xbf16>
    %c64 = arith.constant 64 : index
    %c0_20 = arith.constant 0 : index
    %72 = vector.load %arg12[%c64, %c0_20] : memref<72x256xbf16, #tpu.memory_space<vmem>>, vector<8x256xbf16>
    tpu.vector_store %arg12[%c64, %c0_20], %71 {strides = array<i32>} : memref<72x256xbf16, #tpu.memory_space<vmem>>, vector<8x256xbf16>,
    %c0_21 = arith.constant 0 : index
    %c0_22 = arith.constant 0 : index
    %73 = vector.load %arg7[%c0_21, %c0_22] : memref<4x72xbf16, #tpu.memory_space<vmem>>, vector<4x72xbf16>
    %c0_23 = arith.constant 0 : index
    %c0_24 = arith.constant 0 : index
    %74 = vector.load %arg12[%c0_23, %c0_24] : memref<72x256xbf16, #tpu.memory_space<vmem>>, vector<72x256xbf16>
    %cst_25 = arith.constant dense<0.000000e+00> : vector<4x256xf32>
    %75 = tpu.matmul %73, %74, %cst_25 {dimension_numbers = #tpu.dot_dimension_numbers<[1], [0], [0], [1], [0, 0, 1, 1], [], []>} : vector<4x72xbf16>, vector<72x256xbf16>, vector<4x256xf32> -> vector<4x256xf32>
    %c0_26 = arith.constant 0 : index
    %c0_27 = arith.constant 0 : index
    %c0_28 = arith.constant 0 : index
    %76 = vector.load %arg3[%c0_26, %c0_27, %c0_28] : memref<1x4x9xf32, #tpu.memory_space<vmem>>, vector<1x4x9xf32>
    %77 = vector.shape_cast %76 : vector<1x4x9xf32> to vector<4x9xf32>
    %cst_29 = arith.constant dense<0.000000e+00> : vector<4x256xf32>
    %78 = tpu.matmul %77, %0, %cst_29 {dimension_numbers = #tpu.dot_dimension_numbers<[1], [0], [0], [1], [0, 0, 1, 1], [], []>} : vector<4x9xf32>, vector<9x256xf32>, vector<4x256xf32> -> vector<4x256xf32>
    %c0_30 = arith.constant 0 : index
    %c0_31 = arith.constant 0 : index
    %79 = vector.load %arg8[%c0_30, %c0_31] : memref<4x1xf32, #tpu.memory_space<vmem>>, vector<4x1xf32>
    %80 = vector.broadcast %79 : vector<4x1xf32> to vector<4x256xf32>
    %81 = arith.addf %75, %80 : vector<4x256xf32>
    %82 = arith.addf %81, %78 : vector<4x256xf32>
    %cst_32 = arith.constant 0.000000e+00 : f32
    %83 = vector.broadcast %cst_32 : f32 to vector<4x256xf32>
    %84 = arith.maximumf %82, %83 : vector<4x256xf32>
    %85 = arith.truncf %84 : vector<4x256xf32> to vector<4x256xbf16>
    %86 = vector.extract_strided_slice %85 {offsets = [0, 239], sizes = [4, 17], strides = [1, 1]} : vector<4x256xbf16> to vector<4x17xbf16>
    %87 = vector.extract_strided_slice %85 {offsets = [0, 0], sizes = [4, 239], strides = [1, 1]} : vector<4x256xbf16> to vector<4x239xbf16>
    %88 = tpu.concatenate %86, %87 in 1 : vector<4x17xbf16>, vector<4x239xbf16> -> vector<4x256xbf16>
    %89 = vector.extract_strided_slice %1 {offsets = [0, 0], sizes = [1, 256], strides = [1, 1]} : vector<9x256xbf16> to vector<1x256xbf16>
    %90 = vector.broadcast %89 : vector<1x256xbf16> to vector<4x256xbf16>
    %91 = arith.mulf %88, %90 : vector<4x256xbf16>
    %c0_33 = arith.constant 0 : index
    %c0_34 = arith.constant 0 : index
    %92 = vector.load %arg13[%c0_33, %c0_34] : memref<36x256xbf16, #tpu.memory_space<vmem>>, vector<4x256xbf16>
    tpu.vector_store %arg13[%c0_33, %c0_34], %91 {strides = array<i32>} : memref<36x256xbf16, #tpu.memory_space<vmem>>, vector<4x256xbf16>,
    %93 = vector.extract_strided_slice %85 {offsets = [0, 240], sizes = [4, 16], strides = [1, 1]} : vector<4x256xbf16> to vector<4x16xbf16>
    %94 = vector.extract_strided_slice %85 {offsets = [0, 0], sizes = [4, 240], strides = [1, 1]} : vector<4x256xbf16> to vector<4x240xbf16>
    %95 = tpu.concatenate %93, %94 in 1 : vector<4x16xbf16>, vector<4x240xbf16> -> vector<4x256xbf16>
    %96 = vector.extract_strided_slice %1 {offsets = [1, 0], sizes = [1, 256], strides = [1, 1]} : vector<9x256xbf16> to vector<1x256xbf16>
    %97 = vector.broadcast %96 : vector<1x256xbf16> to vector<4x256xbf16>
    %98 = arith.mulf %95, %97 : vector<4x256xbf16>
    %c4 = arith.constant 4 : index
    %c0_35 = arith.constant 0 : index
    %99 = vector.load %arg13[%c4, %c0_35] : memref<36x256xbf16, #tpu.memory_space<vmem>>, vector<4x256xbf16>
    tpu.vector_store %arg13[%c4, %c0_35], %98 {strides = array<i32>} : memref<36x256xbf16, #tpu.memory_space<vmem>>, vector<4x256xbf16>,
    %100 = vector.extract_strided_slice %85 {offsets = [0, 241], sizes = [4, 15], strides = [1, 1]} : vector<4x256xbf16> to vector<4x15xbf16>
    %101 = vector.extract_strided_slice %85 {offsets = [0, 0], sizes = [4, 241], strides = [1, 1]} : vector<4x256xbf16> to vector<4x241xbf16>
    %102 = tpu.concatenate %100, %101 in 1 : vector<4x15xbf16>, vector<4x241xbf16> -> vector<4x256xbf16>
    %103 = vector.extract_strided_slice %1 {offsets = [2, 0], sizes = [1, 256], strides = [1, 1]} : vector<9x256xbf16> to vector<1x256xbf16>
    %104 = vector.broadcast %103 : vector<1x256xbf16> to vector<4x256xbf16>
    %105 = arith.mulf %102, %104 : vector<4x256xbf16>
    %c8_36 = arith.constant 8 : index
    %c0_37 = arith.constant 0 : index
    %106 = vector.load %arg13[%c8_36, %c0_37] : memref<36x256xbf16, #tpu.memory_space<vmem>>, vector<4x256xbf16>
    tpu.vector_store %arg13[%c8_36, %c0_37], %105 {strides = array<i32>} : memref<36x256xbf16, #tpu.memory_space<vmem>>, vector<4x256xbf16>,
    %107 = vector.extract_strided_slice %85 {offsets = [0, 255], sizes = [4, 1], strides = [1, 1]} : vector<4x256xbf16> to vector<4x1xbf16>
    %108 = vector.extract_strided_slice %85 {offsets = [0, 0], sizes = [4, 255], strides = [1, 1]} : vector<4x256xbf16> to vector<4x255xbf16>
    %109 = tpu.concatenate %107, %108 in 1 : vector<4x1xbf16>, vector<4x255xbf16> -> vector<4x256xbf16>
    %110 = vector.extract_strided_slice %1 {offsets = [3, 0], sizes = [1, 256], strides = [1, 1]} : vector<9x256xbf16> to vector<1x256xbf16>
    %111 = vector.broadcast %110 : vector<1x256xbf16> to vector<4x256xbf16>
    %112 = arith.mulf %109, %111 : vector<4x256xbf16>
    %c12 = arith.constant 12 : index
    %c0_38 = arith.constant 0 : index
    %113 = vector.load %arg13[%c12, %c0_38] : memref<36x256xbf16, #tpu.memory_space<vmem>>, vector<4x256xbf16>
    tpu.vector_store %arg13[%c12, %c0_38], %112 {strides = array<i32>} : memref<36x256xbf16, #tpu.memory_space<vmem>>, vector<4x256xbf16>,
    %114 = vector.extract_strided_slice %1 {offsets = [4, 0], sizes = [1, 256], strides = [1, 1]} : vector<9x256xbf16> to vector<1x256xbf16>
    %115 = vector.broadcast %114 : vector<1x256xbf16> to vector<4x256xbf16>
    %116 = arith.mulf %85, %115 : vector<4x256xbf16>
    %c16_39 = arith.constant 16 : index
    %c0_40 = arith.constant 0 : index
    %117 = vector.load %arg13[%c16_39, %c0_40] : memref<36x256xbf16, #tpu.memory_space<vmem>>, vector<4x256xbf16>
    tpu.vector_store %arg13[%c16_39, %c0_40], %116 {strides = array<i32>} : memref<36x256xbf16, #tpu.memory_space<vmem>>, vector<4x256xbf16>,
    %118 = vector.extract_strided_slice %85 {offsets = [0, 1], sizes = [4, 255], strides = [1, 1]} : vector<4x256xbf16> to vector<4x255xbf16>
    %119 = vector.extract_strided_slice %85 {offsets = [0, 0], sizes = [4, 1], strides = [1, 1]} : vector<4x256xbf16> to vector<4x1xbf16>
    %120 = tpu.concatenate %118, %119 in 1 : vector<4x255xbf16>, vector<4x1xbf16> -> vector<4x256xbf16>
    %121 = vector.extract_strided_slice %1 {offsets = [5, 0], sizes = [1, 256], strides = [1, 1]} : vector<9x256xbf16> to vector<1x256xbf16>
    %122 = vector.broadcast %121 : vector<1x256xbf16> to vector<4x256xbf16>
    %123 = arith.mulf %120, %122 : vector<4x256xbf16>
    %c20 = arith.constant 20 : index
    %c0_41 = arith.constant 0 : index
    %124 = vector.load %arg13[%c20, %c0_41] : memref<36x256xbf16, #tpu.memory_space<vmem>>, vector<4x256xbf16>
    tpu.vector_store %arg13[%c20, %c0_41], %123 {strides = array<i32>} : memref<36x256xbf16, #tpu.memory_space<vmem>>, vector<4x256xbf16>,
    %125 = vector.extract_strided_slice %85 {offsets = [0, 15], sizes = [4, 241], strides = [1, 1]} : vector<4x256xbf16> to vector<4x241xbf16>
    %126 = vector.extract_strided_slice %85 {offsets = [0, 0], sizes = [4, 15], strides = [1, 1]} : vector<4x256xbf16> to vector<4x15xbf16>
    %127 = tpu.concatenate %125, %126 in 1 : vector<4x241xbf16>, vector<4x15xbf16> -> vector<4x256xbf16>
    %128 = vector.extract_strided_slice %1 {offsets = [6, 0], sizes = [1, 256], strides = [1, 1]} : vector<9x256xbf16> to vector<1x256xbf16>
    %129 = vector.broadcast %128 : vector<1x256xbf16> to vector<4x256xbf16>
    %130 = arith.mulf %127, %129 : vector<4x256xbf16>
    %c24_42 = arith.constant 24 : index
    %c0_43 = arith.constant 0 : index
    %131 = vector.load %arg13[%c24_42, %c0_43] : memref<36x256xbf16, #tpu.memory_space<vmem>>, vector<4x256xbf16>
    tpu.vector_store %arg13[%c24_42, %c0_43], %130 {strides = array<i32>} : memref<36x256xbf16, #tpu.memory_space<vmem>>, vector<4x256xbf16>,
    %132 = vector.extract_strided_slice %85 {offsets = [0, 16], sizes = [4, 240], strides = [1, 1]} : vector<4x256xbf16> to vector<4x240xbf16>
    %133 = vector.extract_strided_slice %85 {offsets = [0, 0], sizes = [4, 16], strides = [1, 1]} : vector<4x256xbf16> to vector<4x16xbf16>
    %134 = tpu.concatenate %132, %133 in 1 : vector<4x240xbf16>, vector<4x16xbf16> -> vector<4x256xbf16>
    %135 = vector.extract_strided_slice %1 {offsets = [7, 0], sizes = [1, 256], strides = [1, 1]} : vector<9x256xbf16> to vector<1x256xbf16>
    %136 = vector.broadcast %135 : vector<1x256xbf16> to vector<4x256xbf16>
    %137 = arith.mulf %134, %136 : vector<4x256xbf16>
    %c28 = arith.constant 28 : index
    %c0_44 = arith.constant 0 : index
    %138 = vector.load %arg13[%c28, %c0_44] : memref<36x256xbf16, #tpu.memory_space<vmem>>, vector<4x256xbf16>
    tpu.vector_store %arg13[%c28, %c0_44], %137 {strides = array<i32>} : memref<36x256xbf16, #tpu.memory_space<vmem>>, vector<4x256xbf16>,
    %139 = vector.extract_strided_slice %85 {offsets = [0, 17], sizes = [4, 239], strides = [1, 1]} : vector<4x256xbf16> to vector<4x239xbf16>
    %140 = vector.extract_strided_slice %85 {offsets = [0, 0], sizes = [4, 17], strides = [1, 1]} : vector<4x256xbf16> to vector<4x17xbf16>
    %141 = tpu.concatenate %139, %140 in 1 : vector<4x239xbf16>, vector<4x17xbf16> -> vector<4x256xbf16>
    %142 = vector.extract_strided_slice %1 {offsets = [8, 0], sizes = [1, 256], strides = [1, 1]} : vector<9x256xbf16> to vector<1x256xbf16>
    %143 = vector.broadcast %142 : vector<1x256xbf16> to vector<4x256xbf16>
    %144 = arith.mulf %141, %143 : vector<4x256xbf16>
    %c32_45 = arith.constant 32 : index
    %c0_46 = arith.constant 0 : index
    %145 = vector.load %arg13[%c32_45, %c0_46] : memref<36x256xbf16, #tpu.memory_space<vmem>>, vector<4x256xbf16>
    tpu.vector_store %arg13[%c32_45, %c0_46], %144 {strides = array<i32>} : memref<36x256xbf16, #tpu.memory_space<vmem>>, vector<4x256xbf16>,
    %c0_47 = arith.constant 0 : index
    %c0_48 = arith.constant 0 : index
    %146 = vector.load %arg9[%c0_47, %c0_48] : memref<4x36xbf16, #tpu.memory_space<vmem>>, vector<4x36xbf16>
    %c0_49 = arith.constant 0 : index
    %c0_50 = arith.constant 0 : index
    %147 = vector.load %arg13[%c0_49, %c0_50] : memref<36x256xbf16, #tpu.memory_space<vmem>>, vector<36x256xbf16>
    %cst_51 = arith.constant dense<0.000000e+00> : vector<4x256xf32>
    %148 = tpu.matmul %146, %147, %cst_51 {dimension_numbers = #tpu.dot_dimension_numbers<[1], [0], [0], [1], [0, 0, 1, 1], [], []>} : vector<4x36xbf16>, vector<36x256xbf16>, vector<4x256xf32> -> vector<4x256xf32>
    %c0_52 = arith.constant 0 : index
    %c0_53 = arith.constant 0 : index
    %149 = vector.load %arg10[%c0_52, %c0_53] : memref<4x1xf32, #tpu.memory_space<vmem>>, vector<4x1xf32>
    %150 = vector.broadcast %149 : vector<4x1xf32> to vector<4x256xf32>
    %151 = arith.addf %148, %150 : vector<4x256xf32>
    %cst_54 = arith.constant 0.000000e+00 : f32
    %152 = vector.broadcast %cst_54 : f32 to vector<4x256xf32>
    %153 = arith.maximumf %151, %152 : vector<4x256xf32>
    %c0_55 = arith.constant 0 : index
    %c0_56 = arith.constant 0 : index
    %c0_57 = arith.constant 0 : index
    %154 = vector.load %arg11[%c0_55, %c0_56, %c0_57] : memref<1x4x256xf32, #tpu.memory_space<vmem>>, vector<1x4x256xf32>
    %155 = vector.shape_cast %154 : vector<1x4x256xf32> to vector<4x256xf32>
    %156 = vector.shape_cast %153 : vector<4x256xf32> to vector<1x4x256xf32>
    tpu.vector_store %arg11[%c0_55, %c0_56, %c0_57], %156 {strides = array<i32>} : memref<1x4x256xf32, #tpu.memory_space<vmem>>, vector<1x4x256xf32>,
    return
  }
  func.func @transform_0(%arg0: i32) -> (i32, i32, i32) {
    %c0_i32 = arith.constant 0 : i32
    %c0_i32_0 = arith.constant 0 : i32
    %c0_i32_1 = arith.constant 0 : i32
    return %arg0, %c0_i32, %c0_i32_0 : i32, i32, i32
  }
  func.func @transform_1(%arg0: i32) -> (i32, i32, i32) {
    %c0_i32 = arith.constant 0 : i32
    %c0_i32_0 = arith.constant 0 : i32
    %c0_i32_1 = arith.constant 0 : i32
    return %arg0, %c0_i32, %c0_i32_0 : i32, i32, i32
  }
  func.func @transform_2(%arg0: i32) -> (i32, i32, i32) {
    %c0_i32 = arith.constant 0 : i32
    %c0_i32_0 = arith.constant 0 : i32
    %c0_i32_1 = arith.constant 0 : i32
    return %arg0, %c0_i32, %c0_i32_0 : i32, i32, i32
  }
  func.func @transform_3(%arg0: i32) -> (i32, i32) {
    %c0_i32 = arith.constant 0 : i32
    %c0_i32_0 = arith.constant 0 : i32
    %c0_i32_1 = arith.constant 0 : i32
    return %c0_i32, %c0_i32_0 : i32, i32
  }
  func.func @transform_4(%arg0: i32) -> (i32, i32) {
    %c0_i32 = arith.constant 0 : i32
    %c0_i32_0 = arith.constant 0 : i32
    %c0_i32_1 = arith.constant 0 : i32
    return %c0_i32, %c0_i32_0 : i32, i32
  }
  func.func @transform_5(%arg0: i32) -> (i32, i32) {
    %c0_i32 = arith.constant 0 : i32
    %c0_i32_0 = arith.constant 0 : i32
    %c0_i32_1 = arith.constant 0 : i32
    return %c0_i32, %c0_i32_0 : i32, i32
  }
  func.func @transform_6(%arg0: i32) -> (i32, i32) {
    %c0_i32 = arith.constant 0 : i32
    %c0_i32_0 = arith.constant 0 : i32
    %c0_i32_1 = arith.constant 0 : i32
    return %c0_i32, %c0_i32_0 : i32, i32
  }
  func.func @transform_7(%arg0: i32) -> (i32, i32) {
    %c0_i32 = arith.constant 0 : i32
    %c0_i32_0 = arith.constant 0 : i32
    %c0_i32_1 = arith.constant 0 : i32
    return %c0_i32, %c0_i32_0 : i32, i32
  }
  func.func @transform_8(%arg0: i32) -> (i32, i32) {
    %c0_i32 = arith.constant 0 : i32
    %c0_i32_0 = arith.constant 0 : i32
    %c0_i32_1 = arith.constant 0 : i32
    return %c0_i32, %c0_i32_0 : i32, i32
  }
  func.func @transform_9(%arg0: i32) -> (i32, i32) {
    %c0_i32 = arith.constant 0 : i32
    %c0_i32_0 = arith.constant 0 : i32
    %c0_i32_1 = arith.constant 0 : i32
    return %c0_i32, %c0_i32_0 : i32, i32
  }
  func.func @transform_10(%arg0: i32) -> (i32, i32, i32) {
    %c0_i32 = arith.constant 0 : i32
    %c0_i32_0 = arith.constant 0 : i32
    %c0_i32_1 = arith.constant 0 : i32
    return %arg0, %c0_i32, %c0_i32_0 : i32, i32, i32
  }
}

</mosaic_0001>

<llo_original>
// kernel: decoder_block_forward.1
$region0: #{decoder_block_forward.1}
  #allocation0 [shape = 'u32[]', space=smem, size = 0x4, offset = 0x4, fixed_abs, tag = 'smem constant byte address 0x4 - core index']
  #allocation1 [shape = 'u32[72,128]{1,0:T(1,128)}', space=vmem, size = 0x9000, scoped, tag = 'internal scratch']
  #allocation2 [shape = 'bf16[72,256]{1,0:T(8,128)(2,1)}', space=vmem, size = 0x9000, scoped, tag = 'scratch operand']
  #allocation3 [shape = 'bf16[36,256]{1,0:T(8,128)(2,1)}', space=vmem, size = 0x5000, scoped, tag = 'scratch operand']
  %s0 = inlined_call_operand.vmem [shape: bf16[2,32,256], index: 0, kind: input, shape index: {}]
  %s1 = inlined_call_operand.vmem [shape: bf16[2,4,256], index: 1, kind: input, shape index: {}]
  %s2 = inlined_call_operand.vmem [shape: f32[2,4,9], index: 2, kind: input, shape index: {}]
  %s3 = inlined_call_operand.vmem [shape: f32[9,256], index: 3, kind: input, shape index: {}]
  %s4 = inlined_call_operand.vmem [shape: bf16[4,32], index: 4, kind: input, shape index: {}]
  %s5 = inlined_call_operand.vmem [shape: f32[4,1], index: 5, kind: input, shape index: {}]
  %s6 = inlined_call_operand.vmem [shape: bf16[4,72], index: 6, kind: input, shape index: {}]
  %s7 = inlined_call_operand.vmem [shape: f32[4,1], index: 7, kind: input, shape index: {}]
  %s8 = inlined_call_operand.vmem [shape: bf16[4,36], index: 8, kind: input, shape index: {}]
  %s9 = inlined_call_operand.vmem [shape: f32[4,1], index: 9, kind: input, shape index: {}]
  %s10 = inlined_call_operand.vmem [shape: f32[2,4,256], index: 10, kind: output, shape index: {}]
  %s11 = sld [smem:[#allocation0]]
  $region73: #{decoder_block_forward.1} parent=0
    _
  %s13 = ssub.s32 1, %s11
  %s14 = scalar_select 0, %s13, %s11
  loop: start=0, step=1, limit=4
  $region2: #{decoder_block_forward.1} parent=0 // loop_pre_header
    _
  $region3: #{decoder_block_forward.1} parent=0 // loop_header
    %s16 = sphi 0, %s20
    %p17 = scmp.ge.s32.totalorder %s16, 4
    %s26 = sphi 0, %s28
    %s29 = sphi 0, %s26
    %s30 = sphi 0, %s29
    %s46 = sphi 0, %s30
    %s52 = sphi 0, %s54
    %s55 = sphi 0, %s52
    %s56 = sphi 0, %s55
    %s72 = sphi 0, %s56
    %s78 = sphi 0, %s80
    %s81 = sphi 0, %s78
    %s82 = sphi 0, %s81
    %s98 = sphi 0, %s82
    %s102 = sphi 0, %s102
    %s104 = sphi 0, %s102
    %s105 = sphi 0, %s104
    %s119 = sphi 0, %s105
    %s123 = sphi 0, %s123
    %s125 = sphi 0, %s123
    %s126 = sphi 0, %s125
    %s140 = sphi 0, %s126
    %s144 = sphi 0, %s144
    %s146 = sphi 0, %s144
    %s147 = sphi 0, %s146
    %s161 = sphi 0, %s147
    %s165 = sphi 0, %s165
    %s167 = sphi 0, %s165
    %s168 = sphi 0, %s167
    %s182 = sphi 0, %s168
    %s186 = sphi 0, %s186
    %s188 = sphi 0, %s186
    %s189 = sphi 0, %s188
    %s203 = sphi 0, %s189
    %s207 = sphi 0, %s207
    %s209 = sphi 0, %s207
    %s210 = sphi 0, %s209
    %s224 = sphi 0, %s210
    %s228 = sphi 0, %s228
    %s230 = sphi 0, %s228
    %s231 = sphi 0, %s230
    %s245 = sphi 0, %s231
    %s251 = sphi 0, %s253
    %s254 = sphi 0, %s251
    %s255 = sphi 0, %s254
    %s271 = sphi 0, %s255
  $region4: #{decoder_block_forward.1} parent=0 // loop_header_branch
    %19 = sbr.rel (%p17) target = $region8
  $region5: #{decoder_block_forward.1} parent=0 // loop_body
    %s21 = ssub.s32 %s16, 1
    %s22 = ssub.s32 %s16, 2
    %s23 = sadd.s32 %s16, 1
    %s24 = ssub.s32 %s16, %s23
    %p25 = scmp.eq.s32.totalorder %s24, 0
    %s27 = sadd.s32 %s26, 1
    %s28 = scalar_select %p25, %s26, %s27
    %p31 = pneg %p25
    %p32 = scmp.eq.s32.totalorder %s16, 1
    %p33 = por %p31, %p32
    %p34 = scmp.ne.s32.totalorder %s26, %s29
    %p35 = scmp.eq.s32.totalorder %s16, 0
    %p36 = por %p34, %p35
    %p37 = scmp.ne.s32.totalorder %s26, %s29
    %p38 = scmp.eq.s32.totalorder %s21, 1
    %p39 = por %p37, %p38
    %p40 = scmp.ne.s32.totalorder %s29, %s30
    %p41 = scmp.eq.s32.totalorder %s21, 0
    %p42 = por %p40, %p41
    %p43 = scmp.ne.s32.totalorder %s29, %s30
    %p44 = scmp.eq.s32.totalorder %s22, 1
    %p45 = por %p43, %p44
    %p47 = scmp.ne.s32.totalorder %s30, %s46
    %p48 = scmp.eq.s32.totalorder %s22, 0
    %p49 = por %p47, %p48
    %s50 = ssub.s32 %s16, %s23
    %p51 = scmp.eq.s32.totalorder %s50, 0
    %s53 = sadd.s32 %s52, 1
    %s54 = scalar_select %p51, %s52, %s53
    %p57 = pneg %p51
    %p58 = scmp.eq.s32.totalorder %s16, 1
    %p59 = por %p57, %p58
    %p60 = scmp.ne.s32.totalorder %s52, %s55
    %p61 = scmp.eq.s32.totalorder %s16, 0
    %p62 = por %p60, %p61
    %p63 = scmp.ne.s32.totalorder %s52, %s55
    %p64 = scmp.eq.s32.totalorder %s21, 1
    %p65 = por %p63, %p64
    %p66 = scmp.ne.s32.totalorder %s55, %s56
    %p67 = scmp.eq.s32.totalorder %s21, 0
    %p68 = por %p66, %p67
    %p69 = scmp.ne.s32.totalorder %s55, %s56
    %p70 = scmp.eq.s32.totalorder %s22, 1
    %p71 = por %p69, %p70
    %p73 = scmp.ne.s32.totalorder %s56, %s72
    %p74 = scmp.eq.s32.totalorder %s22, 0
    %p75 = por %p73, %p74
    %s76 = ssub.s32 %s16, %s23
    %p77 = scmp.eq.s32.totalorder %s76, 0
    %s79 = sadd.s32 %s78, 1
    %s80 = scalar_select %p77, %s78, %s79
    %p83 = pneg %p77
    %p84 = scmp.eq.s32.totalorder %s16, 1
    %p85 = por %p83, %p84
    %p86 = scmp.ne.s32.totalorder %s78, %s81
    %p87 = scmp.eq.s32.totalorder %s16, 0
    %p88 = por %p86, %p87
    %p89 = scmp.ne.s32.totalorder %s78, %s81
    %p90 = scmp.eq.s32.totalorder %s21, 1
    %p91 = por %p89, %p90
    %p92 = scmp.ne.s32.totalorder %s81, %s82
    %p93 = scmp.eq.s32.totalorder %s21, 0
    %p94 = por %p92, %p93
    %p95 = scmp.ne.s32.totalorder %s81, %s82
    %p96 = scmp.eq.s32.totalorder %s22, 1
    %p97 = por %p95, %p96
    %p99 = scmp.ne.s32.totalorder %s82, %s98
    %p100 = scmp.eq.s32.totalorder %s22, 0
    %p101 = por %p99, %p100
    %s103 = sadd.s32 %s102, 1
    %p106 = scmp.eq.s32.totalorder %s16, 1
    %p107 = scmp.ne.s32.totalorder %s102, %s104
    %p108 = scmp.eq.s32.totalorder %s16, 0
    %p109 = por %p107, %p108
    %p110 = scmp.ne.s32.totalorder %s102, %s104
    %p111 = scmp.eq.s32.totalorder %s21, 1
    %p112 = por %p110, %p111
    %p113 = scmp.ne.s32.totalorder %s104, %s105
    %p114 = scmp.eq.s32.totalorder %s21, 0
    %p115 = por %p113, %p114
    %p116 = scmp.ne.s32.totalorder %s104, %s105
    %p117 = scmp.eq.s32.totalorder %s22, 1
    %p118 = por %p116, %p117
    %p120 = scmp.ne.s32.totalorder %s105, %s119
    %p121 = scmp.eq.s32.totalorder %s22, 0
    %p122 = por %p120, %p121
    %s124 = sadd.s32 %s123, 1
    %p127 = scmp.eq.s32.totalorder %s16, 1
    %p128 = scmp.ne.s32.totalorder %s123, %s125
    %p129 = scmp.eq.s32.totalorder %s16, 0
    %p130 = por %p128, %p129
    %p131 = scmp.ne.s32.totalorder %s123, %s125
    %p132 = scmp.eq.s32.totalorder %s21, 1
    %p133 = por %p131, %p132
    %p134 = scmp.ne.s32.totalorder %s125, %s126
    %p135 = scmp.eq.s32.totalorder %s21, 0
    %p136 = por %p134, %p135
    %p137 = scmp.ne.s32.totalorder %s125, %s126
    %p138 = scmp.eq.s32.totalorder %s22, 1
    %p139 = por %p137, %p138
    %p141 = scmp.ne.s32.totalorder %s126, %s140
    %p142 = scmp.eq.s32.totalorder %s22, 0
    %p143 = por %p141, %p142
    %s145 = sadd.s32 %s144, 1
    %p148 = scmp.eq.s32.totalorder %s16, 1
    %p149 = scmp.ne.s32.totalorder %s144, %s146
    %p150 = scmp.eq.s32.totalorder %s16, 0
    %p151 = por %p149, %p150
    %p152 = scmp.ne.s32.totalorder %s144, %s146
    %p153 = scmp.eq.s32.totalorder %s21, 1
    %p154 = por %p152, %p153
    %p155 = scmp.ne.s32.totalorder %s146, %s147
    %p156 = scmp.eq.s32.totalorder %s21, 0
    %p157 = por %p155, %p156
    %p158 = scmp.ne.s32.totalorder %s146, %s147
    %p159 = scmp.eq.s32.totalorder %s22, 1
    %p160 = por %p158, %p159
    %p162 = scmp.ne.s32.totalorder %s147, %s161
    %p163 = scmp.eq.s32.totalorder %s22, 0
    %p164 = por %p162, %p163
    %s166 = sadd.s32 %s165, 1
    %p169 = scmp.eq.s32.totalorder %s16, 1
    %p170 = scmp.ne.s32.totalorder %s165, %s167
    %p171 = scmp.eq.s32.totalorder %s16, 0
    %p172 = por %p170, %p171
    %p173 = scmp.ne.s32.totalorder %s165, %s167
    %p174 = scmp.eq.s32.totalorder %s21, 1
    %p175 = por %p173, %p174
    %p176 = scmp.ne.s32.totalorder %s167, %s168
    %p177 = scmp.eq.s32.totalorder %s21, 0
    %p178 = por %p176, %p177
    %p179 = scmp.ne.s32.totalorder %s167, %s168
    %p180 = scmp.eq.s32.totalorder %s22, 1
    %p181 = por %p179, %p180
    %p183 = scmp.ne.s32.totalorder %s168, %s182
    %p184 = scmp.eq.s32.totalorder %s22, 0
    %p185 = por %p183, %p184
    %s187 = sadd.s32 %s186, 1
    %p190 = scmp.eq.s32.totalorder %s16, 1
    %p191 = scmp.ne.s32.totalorder %s186, %s188
    %p192 = scmp.eq.s32.totalorder %s16, 0
    %p193 = por %p191, %p192
    %p194 = scmp.ne.s32.totalorder %s186, %s188
    %p195 = scmp.eq.s32.totalorder %s21, 1
    %p196 = por %p194, %p195
    %p197 = scmp.ne.s32.totalorder %s188, %s189
    %p198 = scmp.eq.s32.totalorder %s21, 0
    %p199 = por %p197, %p198
    %p200 = scmp.ne.s32.totalorder %s188, %s189
    %p201 = scmp.eq.s32.totalorder %s22, 1
    %p202 = por %p200, %p201
    %p204 = scmp.ne.s32.totalorder %s189, %s203
    %p205 = scmp.eq.s32.totalorder %s22, 0
    %p206 = por %p204, %p205
    %s208 = sadd.s32 %s207, 1
    %p211 = scmp.eq.s32.totalorder %s16, 1
    %p212 = scmp.ne.s32.totalorder %s207, %s209
    %p213 = scmp.eq.s32.totalorder %s16, 0
    %p214 = por %p212, %p213
    %p215 = scmp.ne.s32.totalorder %s207, %s209
    %p216 = scmp.eq.s32.totalorder %s21, 1
    %p217 = por %p215, %p216
    %p218 = scmp.ne.s32.totalorder %s209, %s210
    %p219 = scmp.eq.s32.totalorder %s21, 0
    %p220 = por %p218, %p219
    %p221 = scmp.ne.s32.totalorder %s209, %s210
    %p222 = scmp.eq.s32.totalorder %s22, 1
    %p223 = por %p221, %p222
    %p225 = scmp.ne.s32.totalorder %s210, %s224
    %p226 = scmp.eq.s32.totalorder %s22, 0
    %p227 = por %p225, %p226
    %s229 = sadd.s32 %s228, 1
    %p232 = scmp.eq.s32.totalorder %s16, 1
    %p233 = scmp.ne.s32.totalorder %s228, %s230
    %p234 = scmp.eq.s32.totalorder %s16, 0
    %p235 = por %p233, %p234
    %p236 = scmp.ne.s32.totalorder %s228, %s230
    %p237 = scmp.eq.s32.totalorder %s21, 1
    %p238 = por %p236, %p237
    %p239 = scmp.ne.s32.totalorder %s230, %s231
    %p240 = scmp.eq.s32.totalorder %s21, 0
    %p241 = por %p239, %p240
    %p242 = scmp.ne.s32.totalorder %s230, %s231
    %p243 = scmp.eq.s32.totalorder %s22, 1
    %p244 = por %p242, %p243
    %p246 = scmp.ne.s32.totalorder %s231, %s245
    %p247 = scmp.eq.s32.totalorder %s22, 0
    %p248 = por %p246, %p247
    %s249 = ssub.s32 %s16, %s23
    %p250 = scmp.eq.s32.totalorder %s249, 0
    %s252 = sadd.s32 %s251, 1
    %s253 = scalar_select %p250, %s251, %s252
    %p256 = pneg %p250
    %p257 = scmp.eq.s32.totalorder %s16, 1
    %p258 = por %p256, %p257
    %p259 = scmp.ne.s32.totalorder %s251, %s254
    %p260 = scmp.eq.s32.totalorder %s16, 0
    %p261 = por %p259, %p260
    %p262 = scmp.ne.s32.totalorder %s251, %s254
    %p263 = scmp.eq.s32.totalorder %s21, 1
    %p264 = por %p262, %p263
    %p265 = scmp.ne.s32.totalorder %s254, %s255
    %p266 = scmp.eq.s32.totalorder %s21, 0
    %p267 = por %p265, %p266
    %p268 = scmp.ne.s32.totalorder %s254, %s255
    %p269 = scmp.eq.s32.totalorder %s22, 1
    %p270 = por %p268, %p269
    %p272 = scmp.ne.s32.totalorder %s255, %s271
    %p273 = scmp.eq.s32.totalorder %s22, 0
    %p274 = por %p272, %p273
    %p275 = scmp.le.s32.totalorder 1, %s16
    %p276 = scmp.lt.s32.totalorder %s16, 3
    %p277 = pnand %p275, %p276
    %p278 = pneg %p277
    // Predicated region
    $region9: #{decoder_block_forward.1} parent=5 // pred_check
      _
    $region10: #{decoder_block_forward.1} parent=5 // pred_check_branch
      %280 = sbr.rel (%p277) target = $region12
    $region11: #{decoder_block_forward.1} parent=5 // pred_region
      %s281 = ssub.s32 %s16, 1
      // Predicated region
      $region13: #{decoder_block_forward.1} parent=11 // pred_check
        %p282 = pneg %p115
      $region14: #{decoder_block_forward.1} parent=11 // pred_check_branch
        %284 = sbr.rel (%p282) target = $region16
      $region15: #{decoder_block_forward.1} parent=11 // pred_region
        _
      $region16: #{decoder_block_forward.1} parent=11 // pred_fallthru
        _
      // Predicated region
      $region17: #{decoder_block_forward.1} parent=11 // pred_check
        %p285 = pneg %p136
      $region18: #{decoder_block_forward.1} parent=11 // pred_check_branch
        %287 = sbr.rel (%p285) target = $region20
      $region19: #{decoder_block_forward.1} parent=11 // pred_region
        _
      $region20: #{decoder_block_forward.1} parent=11 // pred_fallthru
        _
      // Predicated region
      $region21: #{decoder_block_forward.1} parent=11 // pred_check
        %p288 = pneg %p157
      $region22: #{decoder_block_forward.1} parent=11 // pred_check_branch
        %290 = sbr.rel (%p288) target = $region24
      $region23: #{decoder_block_forward.1} parent=11 // pred_region
        _
      $region24: #{decoder_block_forward.1} parent=11 // pred_fallthru
        _
      // Predicated region
      $region25: #{decoder_block_forward.1} parent=11 // pred_check
        %p291 = pneg %p178
      $region26: #{decoder_block_forward.1} parent=11 // pred_check_branch
        %293 = sbr.rel (%p291) target = $region28
      $region27: #{decoder_block_forward.1} parent=11 // pred_region
        _
      $region28: #{decoder_block_forward.1} parent=11 // pred_fallthru
        _
      // Predicated region
      $region29: #{decoder_block_forward.1} parent=11 // pred_check
        %p294 = pneg %p199
      $region30: #{decoder_block_forward.1} parent=11 // pred_check_branch
        %296 = sbr.rel (%p294) target = $region32
      $region31: #{decoder_block_forward.1} parent=11 // pred_region
        _
      $region32: #{decoder_block_forward.1} parent=11 // pred_fallthru
        _
      // Predicated region
      $region33: #{decoder_block_forward.1} parent=11 // pred_check
        %p297 = pneg %p220
      $region34: #{decoder_block_forward.1} parent=11 // pred_check_branch
        %299 = sbr.rel (%p297) target = $region36
      $region35: #{decoder_block_forward.1} parent=11 // pred_region
        _
      $region36: #{decoder_block_forward.1} parent=11 // pred_fallthru
        _
      // Predicated region
      $region37: #{decoder_block_forward.1} parent=11 // pred_check
        %p300 = pneg %p241
      $region38: #{decoder_block_forward.1} parent=11 // pred_check_branch
        %302 = sbr.rel (%p300) target = $region40
      $region39: #{decoder_block_forward.1} parent=11 // pred_region
        _
      $region40: #{decoder_block_forward.1} parent=11 // pred_fallthru
        _
    $region12: #{decoder_block_forward.1} parent=5 // pred_fallthru
      _
    %p303 = scmp.lt.s32.totalorder %s16, 2
    // Predicated region
    $region41: #{decoder_block_forward.1} parent=5 // pred_check
      %p304 = pneg %p303
    $region42: #{decoder_block_forward.1} parent=5 // pred_check_branch
      %306 = sbr.rel (%p304) target = $region44
    $region43: #{decoder_block_forward.1} parent=5 // pred_region
      // Predicated region
      $region45: #{decoder_block_forward.1} parent=43 // pred_check
        %p307 = pneg %p36
      $region46: #{decoder_block_forward.1} parent=43 // pred_check_branch
        %309 = sbr.rel (%p307) target = $region48
      $region47: #{decoder_block_forward.1} parent=43 // pred_region
        %p310 = scmp.lt.s32.totalorder %s16, 1
        %s311 = scalar_select %p310, %s16, 1
        %s312 = smul.addr %s311, 8
        %s313 = smul.addr %s312, 4
        %s314 = scalar_lea.vmem %s0, %s313
      $region48: #{decoder_block_forward.1} parent=43 // pred_fallthru
        _
      // Predicated region
      $region49: #{decoder_block_forward.1} parent=43 // pred_check
        %p315 = pneg %p62
      $region50: #{decoder_block_forward.1} parent=43 // pred_check_branch
        %317 = sbr.rel (%p315) target = $region52
      $region51: #{decoder_block_forward.1} parent=43 // pred_region
        %p318 = scmp.lt.s32.totalorder %s16, 1
        %s319 = scalar_select %p318, %s16, 1
        %s320 = smul.addr %s319, 2
        %s321 = smul.addr %s320, 2
        %s322 = scalar_lea.vmem %s1, %s321
      $region52: #{decoder_block_forward.1} parent=43 // pred_fallthru
        _
      // Predicated region
      $region53: #{decoder_block_forward.1} parent=43 // pred_check
        %p323 = pneg %p88
      $region54: #{decoder_block_forward.1} parent=43 // pred_check_branch
        %325 = sbr.rel (%p323) target = $region56
      $region55: #{decoder_block_forward.1} parent=43 // pred_region
        %p326 = scmp.lt.s32.totalorder %s16, 1
        %s327 = scalar_select %p326, %s16, 1
        %s328 = smul.addr %s327, 4
        %s329 = scalar_lea.vmem %s2, %s328
      $region56: #{decoder_block_forward.1} parent=43 // pred_fallthru
        _
    $region44: #{decoder_block_forward.1} parent=5 // pred_fallthru
      _
    %p330 = scmp.le.s32.totalorder 1, %s16
    %p331 = scmp.lt.s32.totalorder %s16, 3
    %p332 = pnand %p330, %p331
    %p333 = pneg %p332
    // Predicated region
    $region57: #{decoder_block_forward.1} parent=5 // pred_check
      _
    $region58: #{decoder_block_forward.1} parent=5 // pred_check_branch
      %335 = sbr.rel (%p332) target = $region60
    $region59: #{decoder_block_forward.1} parent=5 // pred_region
      %s336 = ssub.s32 %s16, 1
      %p337 = scmp.lt.s32.totalorder %s21, 1
      %s338 = scalar_select %p337, %s21, 1
      %s339 = smul.addr %s338, 8
      %s340 = smul.addr %s339, 4
      %s341 = scalar_lea.vmem %s0, %s340
      %p342 = pneg %p42
      %p343 = pneg %p39
      %p344 = scmp.lt.s32.totalorder %s21, 1
      %s345 = scalar_select %p344, %s21, 1
      %s346 = smul.addr %s345, 2
      %s347 = smul.addr %s346, 2
      %s348 = scalar_lea.vmem %s1, %s347
      %p349 = pneg %p68
      %p350 = pneg %p65
      %p351 = scmp.lt.s32.totalorder %s21, 1
      %s352 = scalar_select %p351, %s21, 1
      %s353 = smul.addr %s352, 4
      %s354 = scalar_lea.vmem %s2, %s353
      %p355 = pneg %p94
      %p356 = pneg %p91
      %p357 = pneg %p115
      %p358 = pneg %p112
      %p359 = pneg %p136
      %p360 = pneg %p133
      %p361 = pneg %p157
      %p362 = pneg %p154
      %p363 = pneg %p178
      %p364 = pneg %p175
      %p365 = pneg %p199
      %p366 = pneg %p196
      %p367 = pneg %p220
      %p368 = pneg %p217
      %p369 = pneg %p241
      %p370 = pneg %p238
      %p371 = pneg %p267
      %p372 = pneg %p264
      %p373 = scmp.lt.s32.totalorder %s21, 1
      %s374 = scalar_select %p373, %s21, 1
      %s375 = smul.addr %s374, 2
      %s376 = smul.addr %s375, 4
      %s377 = scalar_lea.vmem %s10, %s376
      %p378 = scmp.lt.s32.totalorder %s21, 1
      %s379 = scalar_select %p378, %s21, 1
      %s380 = smul.addr %s379, 8
      %s381 = smul.addr %s380, 4
      %s382 = scalar_lea.vmem %s0, %s381
      %p383 = scmp.lt.s32.totalorder %s21, 1
      %s384 = scalar_select %p383, %s21, 1
      %s385 = smul.addr %s384, 2
      %s386 = smul.addr %s385, 2
      %s387 = scalar_lea.vmem %s1, %s386
      %p388 = scmp.lt.s32.totalorder %s21, 1
      %s389 = scalar_select %p388, %s21, 1
      %s390 = smul.addr %s389, 4
      %s391 = scalar_lea.vmem %s2, %s390
      %p392 = scmp.lt.s32.totalorder %s21, 1
      %s393 = scalar_select %p392, %s21, 1
      %s394 = smul.addr %s393, 2
      %s395 = smul.addr %s394, 4
      %s396 = scalar_lea.vmem %s10, %s395
      %v398 = vld [vmem:[%s3] sm:$0xff]
      %v399 = vld [vmem:[%s3 + $0x8] sm:$0xff]
      %v400 = vld [vmem:[%s3 + $0x10] sm:$0x1]
      %v401 = vld [vmem:[%s3 + $0x18] sm:$0x1]
      %v402 = vpack.c.bf16 %v399, %v398
      %v403 = vpack.c.bf16 %v401, %v400
      %v404 = vld [vmem:[%s4] sm:$0x3]
      %v405 = vld [vmem:[%s382] sm:$0xff]
      %v406 = vld [vmem:[%s382 + $0x8] sm:$0xff]
      %v407 = vld [vmem:[%s382 + $0x10] sm:$0xff]
      %v408 = vld [vmem:[%s382 + $0x18] sm:$0xff]
      %v409 = vld [vmem:[%s5] sm:$0xf]
      %411 = vset.pattern.permute.xlu0 0
      %412 = vperm.xlu0 %411, %v409
      %v413 = vpop.permute.xlu0 %412
      %v419 = vunpack.c.l.b16 %v405
      %v420 = vunpack.c.h.b16 %v405
      %v421 = vunpack.c.l.b16 %v406
      %v422 = vunpack.c.h.b16 %v406
      %v423 = vunpack.c.l.b16 %v407
      %v424 = vunpack.c.h.b16 %v407
      %v425 = vunpack.c.l.b16 %v408
      %v426 = vunpack.c.h.b16 %v408
      %v427 = vpack.c.b16 %v421, %v419
      %v428 = vpack.c.b16 %v422, %v420
      %v429 = vpack.c.b16 %v425, %v423
      %v430 = vpack.c.b16 %v426, %v424
      %vm435 = vcmask 261120
      %v437 = vsel %vm435, %v404, 0
      %439 = vmatpush.bf16.msra.mxu0 0
      %440 = vmatpush.bf16.msra.mxu0 0
      %441 = vmatpush.bf16.msra.mxu0 0
      %442 = vmatpush.bf16.msra.mxu0 0
      %443 = vmatpush.bf16.msra.mxu0 0
      %444 = vmatpush.bf16.msra.mxu0 0
      %445 = vmatpush.bf16.msra.mxu0 %v429
      %446 = vmatpush.bf16.msra.mxu0 %v427
      %447 = vmatmul.bf16.gmra.mxu0 %v437
      %v448 = vpop.f32.mrf.mxu0
      %v449 = vadd.f32 %v413, %v448
      %v450 = vpop.f32.mrf.mxu0
      %451 = vdwg.mxu0
      %452 = vmatpush.bf16.msra.mxu0 0
      %453 = vmatpush.bf16.msra.mxu0 0
      %454 = vmatpush.bf16.msra.mxu0 0
      %455 = vmatpush.bf16.msra.mxu0 0
      %456 = vmatpush.bf16.msra.mxu0 0
      %457 = vmatpush.bf16.msra.mxu0 0
      %458 = vmatpush.bf16.msra.mxu0 %v430
      %459 = vmatpush.bf16.msra.mxu0 %v428
      %460 = vmatmul.bf16.gmra.mxu0 %v437
      %v461 = vpop.f32.mrf.mxu0
      %v462 = vadd.f32 %v413, %v461
      %v463 = vpop.f32.mrf.mxu0
      %464 = vdwg.mxu0
      %v465 = vpack.c.bf16 %v462, %v449
      %v466 = vld [vmem:[%s387] sm:$0xf]
      %v468 = vunpack.c.l.b16 %v465
      %v469 = vunpack.c.h.b16 %v465
      %v470 = vpack.c.b16 %v468, %v468
      %v471 = vpack.c.b16 %v469, %v469
      %s473 = scalar_lea.vmem [#allocation1], 1
      %474 = vst [vmem:[%s473] ss:$4 sm:$0xff] %v466
      %v475 = vld.sshfl [vmem:[#allocation1] sm:$0xff pattern:$0x73625140]
      %v476 = vld.sshfl [vmem:[#allocation1 + $0x8] sm:$0xff pattern:$0x73625140]
      %vm477 = vcmask 1041408
      %v479 = vsel %vm477, %v470, %v475
      %v482 = vsel %vm477, %v471, %v476
      %485 = vrot.lane.b32.xlu0 %v482, 17
      %v486 = vpop.permute.xlu0 %485
      %488 = vrot.lane.b32.xlu0 %v479, 17
      %v489 = vpop.permute.xlu0 %488
      %vm490 = vcmask 138240
      %v491 = vsel %vm490, %v489, %v486
      %vm493 = vcmask 138240
      %v496 = vsel %vm493, %v486, %v489
      %v499 = vunpack.c.l.b16 %v402
      %v500 = vunpack.c.h.b16 %v402
      %v501 = vpack.c.b16 %v499, %v499
      %v502 = vpack.c.b16 %v500, %v500
      %v504 = vpack.i.b16 %v501, %v501
      %v506 = vperm.slane %v504, 0
      %v508 = vpack.i.b16 %v502, %v502
      %v510 = vperm.slane %v508, 0
      %v511 = vunpack.c.l.bf16 %v496
      %v512 = vunpack.c.l.bf16 %v491
      %v513 = vunpack.c.l.bf16 %v506
      %v514 = vunpack.c.l.bf16 %v510
      %v515 = vmul.f32 %v511, %v513
      %v516 = vmul.f32 %v512, %v514
      %v517 = vpack.c.bf16 %v516, %v515
      %518 = vst [vmem:[#allocation2] sm:$0xff] %v517
      %519 = vrot.lane.b32.xlu0 %v482, 16
      %v520 = vpop.permute.xlu0 %519
      %521 = vrot.lane.b32.xlu0 %v479, 16
      %v522 = vpop.permute.xlu0 %521
      %vm523 = vcmask 130048
      %v524 = vsel %vm523, %v522, %v520
      %vm526 = vcmask 130048
      %v529 = vsel %vm526, %v520, %v522
      %v531 = vshrl.u32 %v501, 16
      %v532 = vpack.i.b16 %v531, %v531
      %v534 = vperm.slane %v532, 0
      %v535 = vshrl.u32 %v502, 16
      %v536 = vpack.i.b16 %v535, %v535
      %v538 = vperm.slane %v536, 0
      %v539 = vunpack.c.l.bf16 %v529
      %v540 = vunpack.c.l.bf16 %v524
      %v541 = vunpack.c.l.bf16 %v534
      %v542 = vunpack.c.l.bf16 %v538
      %v543 = vmul.f32 %v539, %v541
      %v544 = vmul.f32 %v540, %v542
      %v545 = vpack.c.bf16 %v544, %v543
      %546 = vst [vmem:[#allocation2 + $0x8] sm:$0xff] %v545
      %547 = vrot.lane.b32.xlu0 %v482, 15
      %v548 = vpop.permute.xlu0 %547
      %549 = vrot.lane.b32.xlu0 %v479, 15
      %v550 = vpop.permute.xlu0 %549
      %vm551 = vcmask 121856
      %v552 = vsel %vm551, %v550, %v548
      %vm554 = vcmask 121856
      %v557 = vsel %vm554, %v548, %v550
      %v559 = vperm.slane %v504, 1
      %v560 = vperm.slane %v508, 1
      %v561 = vunpack.c.l.bf16 %v557
      %v562 = vunpack.c.l.bf16 %v552
      %v563 = vunpack.c.l.bf16 %v559
      %v564 = vunpack.c.l.bf16 %v560
      %v565 = vmul.f32 %v561, %v563
      %v566 = vmul.f32 %v562, %v564
      %v567 = vpack.c.bf16 %v566, %v565
      %568 = vst [vmem:[#allocation2 + $0x10] sm:$0xff] %v567
      %569 = vrot.lane.b32.xlu0 %v482, 1
      %v570 = vpop.permute.xlu0 %569
      %571 = vrot.lane.b32.xlu0 %v479, 1
      %v572 = vpop.permute.xlu0 %571
      %vm573 = vcmask 7168
      %v574 = vsel %vm573, %v572, %v570
      %vm576 = vcmask 7168
      %v579 = vsel %vm576, %v570, %v572
      %v581 = vperm.slane %v532, 1
      %v582 = vperm.slane %v536, 1
      %v583 = vunpack.c.l.bf16 %v579
      %v584 = vunpack.c.l.bf16 %v574
      %v585 = vunpack.c.l.bf16 %v581
      %v586 = vunpack.c.l.bf16 %v582
      %v587 = vmul.f32 %v583, %v585
      %v588 = vmul.f32 %v584, %v586
      %v589 = vpack.c.bf16 %v588, %v587
      %590 = vst [vmem:[#allocation2 + $0x18] sm:$0xff] %v589
      %v591 = vperm.slane %v504, 2
      %v592 = vperm.slane %v508, 2
      %v593 = vunpack.c.l.bf16 %v479
      %v594 = vunpack.c.l.bf16 %v482
      %v595 = vunpack.c.l.bf16 %v591
      %v596 = vunpack.c.l.bf16 %v592
      %v597 = vmul.f32 %v593, %v595
      %v598 = vmul.f32 %v594, %v596
      %v599 = vpack.c.bf16 %v598, %v597
      %600 = vst [vmem:[#allocation2 + $0x20] sm:$0xff] %v599
      %601 = vrot.lane.b32.xlu0 %v479, 127
      %v602 = vpop.permute.xlu0 %601
      %603 = vrot.lane.b32.xlu0 %v482, 127
      %v604 = vpop.permute.xlu0 %603
      %vm605 = vcmask 1039360
      %v606 = vsel %vm605, %v602, %v604
      %vm608 = vcmask 1039360
      %v611 = vsel %vm608, %v604, %v602
      %v613 = vperm.slane %v532, 2
      %v614 = vperm.slane %v536, 2
      %v615 = vunpack.c.l.bf16 %v606
      %v616 = vunpack.c.l.bf16 %v611
      %v617 = vunpack.c.l.bf16 %v613
      %v618 = vunpack.c.l.bf16 %v614
      %v619 = vmul.f32 %v615, %v617
      %v620 = vmul.f32 %v616, %v618
      %v621 = vpack.c.bf16 %v620, %v619
      %622 = vst [vmem:[#allocation2 + $0x28] sm:$0xff] %v621
      %623 = vrot.lane.b32.xlu0 %v479, 113
      %v624 = vpop.permute.xlu0 %623
      %625 = vrot.lane.b32.xlu0 %v482, 113
      %v626 = vpop.permute.xlu0 %625
      %vm627 = vcmask 924672
      %v628 = vsel %vm627, %v624, %v626
      %vm630 = vcmask 924672
      %v633 = vsel %vm630, %v626, %v624
      %v635 = vperm.slane %v504, 3
      %v636 = vperm.slane %v508, 3
      %v637 = vunpack.c.l.bf16 %v628
      %v638 = vunpack.c.l.bf16 %v633
      %v639 = vunpack.c.l.bf16 %v635
      %v640 = vunpack.c.l.bf16 %v636
      %v641 = vmul.f32 %v637, %v639
      %v642 = vmul.f32 %v638, %v640
      %v643 = vpack.c.bf16 %v642, %v641
      %644 = vst [vmem:[#allocation2 + $0x30] sm:$0xff] %v643
      %645 = vrot.lane.b32.xlu0 %v479, 112
      %v646 = vpop.permute.xlu0 %645
      %647 = vrot.lane.b32.xlu0 %v482, 112
      %v648 = vpop.permute.xlu0 %647
      %vm649 = vcmask 916480
      %v650 = vsel %vm649, %v646, %v648
      %vm652 = vcmask 916480
      %v655 = vsel %vm652, %v648, %v646
      %v657 = vperm.slane %v532, 3
      %v658 = vperm.slane %v536, 3
      %v659 = vunpack.c.l.bf16 %v650
      %v660 = vunpack.c.l.bf16 %v655
      %v661 = vunpack.c.l.bf16 %v657
      %v662 = vunpack.c.l.bf16 %v658
      %v663 = vmul.f32 %v659, %v661
      %v664 = vmul.f32 %v660, %v662
      %v665 = vpack.c.bf16 %v664, %v663
      %666 = vst [vmem:[#allocation2 + $0x38] sm:$0xff] %v665
      %667 = vrot.lane.b32.xlu0 %v479, 111
      %v668 = vpop.permute.xlu0 %667
      %669 = vrot.lane.b32.xlu0 %v482, 111
      %v670 = vpop.permute.xlu0 %669
      %vm671 = vcmask 908288
      %v672 = vsel %vm671, %v668, %v670
      %vm674 = vcmask 908288
      %v677 = vsel %vm674, %v670, %v668
      %v680 = vunpack.c.l.b16 %v403
      %v681 = vunpack.c.h.b16 %v403
      %v682 = vpack.c.b16 %v680, %v680
      %v683 = vpack.c.b16 %v681, %v681
      %v685 = vpack.i.b16 %v682, %v682
      %v687 = vperm.slane %v685, 0
      %v689 = vpack.i.b16 %v683, %v683
      %v691 = vperm.slane %v689, 0
      %v692 = vunpack.c.l.bf16 %v672
      %v693 = vunpack.c.l.bf16 %v677
      %v694 = vunpack.c.l.bf16 %v687
      %v695 = vunpack.c.l.bf16 %v691
      %v696 = vmul.f32 %v692, %v694
      %v697 = vmul.f32 %v693, %v695
      %v698 = vpack.c.bf16 %v697, %v696
      %699 = vst [vmem:[#allocation2 + $0x40] sm:$0xff] %v698
      %v700 = vld [vmem:[%s6] sm:$0x3]
      %v701 = vld [vmem:[#allocation2] sm:$0xff]
      %v702 = vld [vmem:[#allocation2 + $0x8] sm:$0xff]
      %v703 = vld [vmem:[#allocation2 + $0x10] sm:$0xff]
      %v704 = vld [vmem:[#allocation2 + $0x18] sm:$0xff]
      %v705 = vld [vmem:[#allocation2 + $0x20] sm:$0xff]
      %v706 = vld [vmem:[#allocation2 + $0x28] sm:$0xff]
      %v707 = vld [vmem:[#allocation2 + $0x30] sm:$0xff]
      %v708 = vld [vmem:[#allocation2 + $0x38] sm:$0xff]
      %v709 = vld [vmem:[#allocation2 + $0x40] sm:$0xff]
      %v710 = vld [vmem:[%s391] sm:$0xf]
      %vm711 = vcmask 72704
      %v713 = vsel %vm711, %v710, 0
      %vm715 = vcmask 1040384
      %v717 = vsel %vm715, %v400, 0
      %v720 = vsel %vm715, %v401, 0
      %722 = vmatpush.msra.mxu0 0.0
      %723 = vmatpush.msra.mxu0 0.0
      %724 = vmatpush.msra.mxu0 0.0
      %725 = vmatpush.msra.mxu0 0.0
      %726 = vmatpush.msra.mxu0 0.0
      %727 = vmatpush.msra.mxu0 0.0
      %728 = vmatpush.msra.mxu0 0.0
      %729 = vmatpush.msra.mxu0 0.0
      %730 = vmatpush.msra.mxu0 0.0
      %731 = vmatpush.msra.mxu0 0.0
      %732 = vmatpush.msra.mxu0 0.0
      %733 = vmatpush.msra.mxu0 0.0
      %734 = vmatpush.msra.mxu0 0.0
      %735 = vmatpush.msra.mxu0 0.0
      %736 = vmatpush.msra.mxu0 %v717
      %737 = vmatpush.msra.mxu0 %v398
      %738 = vmatmul.f32.gmra.mxu0 %v713
      %v739 = vpop.f32.mrf.mxu0
      %v740 = vadd.f32 0.0, %v739
      %741 = vdwg.mxu0
      %742 = vmatpush.msra.mxu0 0.0
      %743 = vmatpush.msra.mxu0 0.0
      %744 = vmatpush.msra.mxu0 0.0
      %745 = vmatpush.msra.mxu0 0.0
      %746 = vmatpush.msra.mxu0 0.0
      %747 = vmatpush.msra.mxu0 0.0
      %748 = vmatpush.msra.mxu0 0.0
      %749 = vmatpush.msra.mxu0 0.0
      %750 = vmatpush.msra.mxu0 0.0
      %751 = vmatpush.msra.mxu0 0.0
      %752 = vmatpush.msra.mxu0 0.0
      %753 = vmatpush.msra.mxu0 0.0
      %754 = vmatpush.msra.mxu0 0.0
      %755 = vmatpush.msra.mxu0 0.0
      %756 = vmatpush.msra.mxu0 %v720
      %757 = vmatpush.msra.mxu0 %v399
      %758 = vmatmul.f32.gmra.mxu0 %v713
      %v759 = vpop.f32.mrf.mxu0
      %v760 = vadd.f32 0.0, %v759
      %761 = vdwg.mxu0
      %v762 = vld [vmem:[%s7] sm:$0xf]
      %764 = vset.pattern.permute.xlu0 0
      %765 = vperm.xlu0 %764, %v762
      %v766 = vpop.permute.xlu0 %765
      %v777 = vunpack.c.l.b16 %v701
      %v778 = vunpack.c.h.b16 %v701
      %v779 = vunpack.c.l.b16 %v702
      %v780 = vunpack.c.h.b16 %v702
      %v781 = vunpack.c.l.b16 %v703
      %v782 = vunpack.c.h.b16 %v703
      %v783 = vunpack.c.l.b16 %v704
      %v784 = vunpack.c.h.b16 %v704
      %v785 = vunpack.c.l.b16 %v705
      %v786 = vunpack.c.h.b16 %v705
      %v787 = vunpack.c.l.b16 %v706
      %v788 = vunpack.c.h.b16 %v706
      %v789 = vunpack.c.l.b16 %v707
      %v790 = vunpack.c.h.b16 %v707
      %v791 = vunpack.c.l.b16 %v708
      %v792 = vunpack.c.h.b16 %v708
      %v793 = vunpack.c.l.b16 %v709
      %v794 = vunpack.c.h.b16 %v709
      %v795 = vpack.c.b16 %v779, %v777
      %v796 = vpack.c.b16 %v780, %v778
      %v797 = vpack.c.b16 %v783, %v781
      %v798 = vpack.c.b16 %v784, %v782
      %v799 = vpack.c.b16 %v787, %v785
      %v800 = vpack.c.b16 %v788, %v786
      %v801 = vpack.c.b16 %v791, %v789
      %v802 = vpack.c.b16 %v792, %v790
      %v803 = vpack.c.b16 %v793, %v793
      %v804 = vpack.c.b16 %v794, %v794
      %vm813 = vcmask 588800
      %v815 = vsel %vm813, %v700, 0
      %vm817 = vcmask 1043456
      %v819 = vsel %vm817, %v803, 0
      %v822 = vsel %vm817, %v804, 0
      %824 = vmatpush.bf16.msra.mxu0 0
      %825 = vmatpush.bf16.msra.mxu0 0
      %826 = vmatpush.bf16.msra.mxu0 0
      %827 = vmatpush.bf16.msra.mxu0 %v819
      %828 = vmatpush.bf16.msra.mxu0 %v801
      %829 = vmatpush.bf16.msra.mxu0 %v799
      %830 = vmatpush.bf16.msra.mxu0 %v797
      %831 = vmatpush.bf16.msra.mxu0 %v795
      %832 = vmatmul.bf16.gmra.mxu0 %v815
      %v833 = vpop.f32.mrf.mxu0
      %v834 = vadd.f32 %v766, %v833
      %v835 = vpop.f32.mrf.mxu0
      %836 = vdwg.mxu0
      %837 = vmatpush.bf16.msra.mxu0 0
      %838 = vmatpush.bf16.msra.mxu0 0
      %839 = vmatpush.bf16.msra.mxu0 0
      %840 = vmatpush.bf16.msra.mxu0 %v822
      %841 = vmatpush.bf16.msra.mxu0 %v802
      %842 = vmatpush.bf16.msra.mxu0 %v800
      %843 = vmatpush.bf16.msra.mxu0 %v798
      %844 = vmatpush.bf16.msra.mxu0 %v796
      %845 = vmatmul.bf16.gmra.mxu0 %v815
      %v846 = vpop.f32.mrf.mxu0
      %v847 = vadd.f32 %v766, %v846
      %v848 = vpop.f32.mrf.mxu0
      %849 = vdwg.mxu0
      %v850 = vadd.f32 %v834, %v740
      %v851 = vadd.f32 %v847, %v760
      %v852 = vmax.f32 %v850, 0.0
      %v853 = vmax.f32 %v851, 0.0
      %v854 = vpack.c.bf16 %v853, %v852
      %v856 = vunpack.c.h.b16 %v854
      %v857 = vpack.c.b16 %v856, %v856
      %858 = vrot.lane.b32.xlu0 %v857, 17
      %v859 = vpop.permute.xlu0 %858
      %v860 = vunpack.c.l.b16 %v854
      %v861 = vpack.c.b16 %v860, %v860
      %862 = vrot.lane.b32.xlu0 %v861, 17
      %v863 = vpop.permute.xlu0 %862
      %v864 = vsel %vm490, %v863, %v859
      %v868 = vsel %vm493, %v859, %v863
      %v870 = vunpack.c.l.bf16 %v868
      %v871 = vunpack.c.l.bf16 %v864
      %v872 = vmul.f32 %v870, %v513
      %v873 = vmul.f32 %v871, %v514
      %v874 = vpack.c.bf16 %v873, %v872
      %875 = vst [vmem:[#allocation3] sm:$0x33] %v874
      %876 = vrot.lane.b32.xlu0 %v857, 16
      %v877 = vpop.permute.xlu0 %876
      %878 = vrot.lane.b32.xlu0 %v861, 16
      %v879 = vpop.permute.xlu0 %878
      %v880 = vsel %vm523, %v879, %v877
      %v884 = vsel %vm526, %v877, %v879
      %v886 = vunpack.c.l.bf16 %v884
      %v887 = vunpack.c.l.bf16 %v880
      %v888 = vmul.f32 %v886, %v541
      %v889 = vmul.f32 %v887, %v542
      %v890 = vpack.c.bf16 %v889, %v888
      %v892 = vrot.slane %v890, 6
      %894 = vst [vmem:[#allocation3] sm:$0xcc] %v892
      %895 = vrot.lane.b32.xlu0 %v857, 15
      %v896 = vpop.permute.xlu0 %895
      %897 = vrot.lane.b32.xlu0 %v861, 15
      %v898 = vpop.permute.xlu0 %897
      %v899 = vsel %vm551, %v898, %v896
      %v903 = vsel %vm554, %v896, %v898
      %v905 = vunpack.c.l.bf16 %v903
      %v906 = vunpack.c.l.bf16 %v899
      %v907 = vmul.f32 %v905, %v563
      %v908 = vmul.f32 %v906, %v564
      %v909 = vpack.c.bf16 %v908, %v907
      %910 = vst [vmem:[#allocation3 + $0x8] sm:$0x33] %v909
      %911 = vrot.lane.b32.xlu0 %v857, 1
      %v912 = vpop.permute.xlu0 %911
      %913 = vrot.lane.b32.xlu0 %v861, 1
      %v914 = vpop.permute.xlu0 %913
      %v915 = vsel %vm573, %v914, %v912
      %v919 = vsel %vm576, %v912, %v914
      %v921 = vunpack.c.l.bf16 %v919
      %v922 = vunpack.c.l.bf16 %v915
      %v923 = vmul.f32 %v921, %v585
      %v924 = vmul.f32 %v922, %v586
      %v925 = vpack.c.bf16 %v924, %v923
      %v927 = vrot.slane %v925, 6
      %929 = vst [vmem:[#allocation3 + $0x8] sm:$0xcc] %v927
      %v930 = vunpack.c.l.bf16 %v854
      %v931 = vunpack.c.h.bf16 %v854
      %v932 = vmul.f32 %v930, %v595
      %v933 = vmul.f32 %v931, %v596
      %v934 = vpack.c.bf16 %v933, %v932
      %935 = vst [vmem:[#allocation3 + $0x10] sm:$0x33] %v934
      %936 = vrot.lane.b32.xlu0 %v861, 127
      %v937 = vpop.permute.xlu0 %936
      %938 = vrot.lane.b32.xlu0 %v857, 127
      %v939 = vpop.permute.xlu0 %938
      %v940 = vsel %vm605, %v937, %v939
      %v944 = vsel %vm608, %v939, %v937
      %v946 = vunpack.c.l.bf16 %v940
      %v947 = vunpack.c.l.bf16 %v944
      %v948 = vmul.f32 %v946, %v617
      %v949 = vmul.f32 %v947, %v618
      %v950 = vpack.c.bf16 %v949, %v948
      %v952 = vrot.slane %v950, 6
      %954 = vst [vmem:[#allocation3 + $0x10] sm:$0xcc] %v952
      %955 = vrot.lane.b32.xlu0 %v861, 113
      %v956 = vpop.permute.xlu0 %955
      %957 = vrot.lane.b32.xlu0 %v857, 113
      %v958 = vpop.permute.xlu0 %957
      %v959 = vsel %vm627, %v956, %v958
      %v963 = vsel %vm630, %v958, %v956
      %v965 = vunpack.c.l.bf16 %v959
      %v966 = vunpack.c.l.bf16 %v963
      %v967 = vmul.f32 %v965, %v639
      %v968 = vmul.f32 %v966, %v640
      %v969 = vpack.c.bf16 %v968, %v967
      %970 = vst [vmem:[#allocation3 + $0x18] sm:$0x33] %v969
      %971 = vrot.lane.b32.xlu0 %v861, 112
      %v972 = vpop.permute.xlu0 %971
      %973 = vrot.lane.b32.xlu0 %v857, 112
      %v974 = vpop.permute.xlu0 %973
      %v975 = vsel %vm649, %v972, %v974
      %v979 = vsel %vm652, %v974, %v972
      %v981 = vunpack.c.l.bf16 %v975
      %v982 = vunpack.c.l.bf16 %v979
      %v983 = vmul.f32 %v981, %v661
      %v984 = vmul.f32 %v982, %v662
      %v985 = vpack.c.bf16 %v984, %v983
      %v987 = vrot.slane %v985, 6
      %989 = vst [vmem:[#allocation3 + $0x18] sm:$0xcc] %v987
      %990 = vrot.lane.b32.xlu0 %v861, 111
      %v991 = vpop.permute.xlu0 %990
      %992 = vrot.lane.b32.xlu0 %v857, 111
      %v993 = vpop.permute.xlu0 %992
      %v994 = vsel %vm671, %v991, %v993
      %v998 = vsel %vm674, %v993, %v991
      %v1000 = vunpack.c.l.bf16 %v994
      %v1001 = vunpack.c.l.bf16 %v998
      %v1002 = vmul.f32 %v1000, %v694
      %v1003 = vmul.f32 %v1001, %v695
      %v1004 = vpack.c.bf16 %v1003, %v1002
      %1005 = vst [vmem:[#allocation3 + $0x20] sm:$0x33] %v1004
      %v1006 = vld [vmem:[%s8] sm:$0x3]
      %v1007 = vld [vmem:[#allocation3] sm:$0xff]
      %v1008 = vld [vmem:[#allocation3 + $0x8] sm:$0xff]
      %v1009 = vld [vmem:[#allocation3 + $0x10] sm:$0xff]
      %v1010 = vld [vmem:[#allocation3 + $0x18] sm:$0xff]
      %v1011 = vld [vmem:[#allocation3 + $0x20] sm:$0x33]
      %v1012 = vld [vmem:[%s9] sm:$0xf]
      %1014 = vset.pattern.permute.xlu0 0
      %1015 = vperm.xlu0 %1014, %v1012
      %v1016 = vpop.permute.xlu0 %1015
      %v1023 = vunpack.c.l.b16 %v1007
      %v1024 = vunpack.c.h.b16 %v1007
      %v1025 = vunpack.c.l.b16 %v1008
      %v1026 = vunpack.c.h.b16 %v1008
      %v1027 = vunpack.c.l.b16 %v1009
      %v1028 = vunpack.c.h.b16 %v1009
      %v1029 = vunpack.c.l.b16 %v1010
      %v1030 = vunpack.c.h.b16 %v1010
      %v1031 = vunpack.c.l.b16 %v1011
      %v1032 = vunpack.c.h.b16 %v1011
      %v1033 = vpack.c.b16 %v1025, %v1023
      %v1034 = vpack.c.b16 %v1026, %v1024
      %v1035 = vpack.c.b16 %v1029, %v1027
      %v1036 = vpack.c.b16 %v1030, %v1028
      %v1037 = vpack.c.b16 %v1031, %v1031
      %v1038 = vpack.c.b16 %v1032, %v1032
      %vm1043 = vcmask 293888
      %v1045 = vsel %vm1043, %v1006, 0
      %v1048 = vsel %vm477, %v1037, 0
      %v1051 = vsel %vm477, %v1038, 0
      %1053 = vmatpush.bf16.msra.mxu0 0
      %1054 = vmatpush.bf16.msra.mxu0 0
      %1055 = vmatpush.bf16.msra.mxu0 0
      %1056 = vmatpush.bf16.msra.mxu0 0
      %1057 = vmatpush.bf16.msra.mxu0 0
      %1058 = vmatpush.bf16.msra.mxu0 %v1048
      %1059 = vmatpush.bf16.msra.mxu0 %v1035
      %1060 = vmatpush.bf16.msra.mxu0 %v1033
      %1061 = vmatmul.bf16.gmra.mxu0 %v1045
      %v1062 = vpop.f32.mrf.mxu0
      %v1063 = vadd.f32 %v1016, %v1062
      %v1064 = vpop.f32.mrf.mxu0
      %1065 = vdwg.mxu0
      %1066 = vmatpush.bf16.msra.mxu0 0
      %1067 = vmatpush.bf16.msra.mxu0 0
      %1068 = vmatpush.bf16.msra.mxu0 0
      %1069 = vmatpush.bf16.msra.mxu0 0
      %1070 = vmatpush.bf16.msra.mxu0 0
      %1071 = vmatpush.bf16.msra.mxu0 %v1051
      %1072 = vmatpush.bf16.msra.mxu0 %v1036
      %1073 = vmatpush.bf16.msra.mxu0 %v1034
      %1074 = vmatmul.bf16.gmra.mxu0 %v1045
      %v1075 = vpop.f32.mrf.mxu0
      %v1076 = vadd.f32 %v1016, %v1075
      %v1077 = vpop.f32.mrf.mxu0
      %1078 = vdwg.mxu0
      %v1079 = vmax.f32 %v1063, 0.0
      %v1080 = vmax.f32 %v1076, 0.0
      %v1083 = vrot.slane %v1080, 4
      %v1084 = vsel %vm817, %v1079, %v1083
      %1086 = vst [vmem:[%s396] sm:$0xff] %v1084
      %p1087 = scmp.lt.s32.totalorder %s21, 1
      %s1088 = scalar_select %p1087, %s21, 1
      %s1089 = smul.addr %s1088, 2
      %s1090 = smul.addr %s1089, 4
      %s1091 = scalar_lea.vmem %s10, %s1090
      // Predicated region
      $region61: #{decoder_block_forward.1} parent=59 // pred_check
        %p1092 = pneg %p264
      $region62: #{decoder_block_forward.1} parent=59 // pred_check_branch
        %1094 = sbr.rel (%p1092) target = $region64
      $region63: #{decoder_block_forward.1} parent=59 // pred_region
        _
      $region64: #{decoder_block_forward.1} parent=59 // pred_fallthru
        _
    $region60: #{decoder_block_forward.1} parent=5 // pred_fallthru
      _
    %p1095 = scmp.le.s32.totalorder 2, %s16
    // Predicated region
    $region65: #{decoder_block_forward.1} parent=5 // pred_check
      %p1096 = pneg %p1095
    $region66: #{decoder_block_forward.1} parent=5 // pred_check_branch
      %1098 = sbr.rel (%p1096) target = $region68
    $region67: #{decoder_block_forward.1} parent=5 // pred_region
      %s1099 = ssub.s32 %s16, 2
      // Predicated region
      $region69: #{decoder_block_forward.1} parent=67 // pred_check
        %p1100 = pneg %p270
      $region70: #{decoder_block_forward.1} parent=67 // pred_check_branch
        %1102 = sbr.rel (%p1100) target = $region72
      $region71: #{decoder_block_forward.1} parent=67 // pred_region
        %p1103 = scmp.lt.s32.totalorder %s22, 1
        %s1104 = scalar_select %p1103, %s22, 1
        %s1105 = smul.addr %s1104, 2
        %s1106 = smul.addr %s1105, 4
        %s1107 = scalar_lea.vmem %s10, %s1106
      $region72: #{decoder_block_forward.1} parent=67 // pred_fallthru
        _
    $region68: #{decoder_block_forward.1} parent=5 // pred_fallthru
      _
  $region6: #{decoder_block_forward.1} parent=0 // loop_footer
    %s20 = sadd.s32 1, %s16
  $region7: #{decoder_block_forward.1} parent=0 // loop_footer_branch
    %15 = sbr.rel target = $region3
  $region8: #{decoder_block_forward.1} parent=0 // loop_exit
    _

</llo_original>
